<compile_context>
chip_gen: v7x
topology: tpu7x:2x2x1
jax: 0.10.0
libtpu: 0.0.40
codegen_flags: <defaults>
</compile_context>

<pallas_src>
import functools

import jax
import jax.numpy as jnp
from jax.experimental import pallas as pl
from jax.experimental.pallas import tpu as pltpu


def _round_up(n, m):
    return ((n + m - 1) // m) * m


# ----------------------------------------------------------------------------
# Static slab layout (row offsets into the single packed weight array)
# ----------------------------------------------------------------------------
def _slab_layout(input_size, hidden_size, num_layers, output_size, n_outputs):
    H = hidden_size
    four_h = 4 * H
    n_heads_cols = n_outputs * output_size
    n_pad = _round_up(n_heads_cols, 128)          # lane-dense heads output
    width = max(_round_up(four_h, 128), n_pad)    # slab lane width

    off = {}
    r = 0
    off["wih0"] = r;  r += width                          # layer-0 input proj (padded K)
    off["whh0"] = r;  r += _round_up(H, 8)                # layer-0 recurrent
    off["fused"] = r; r += (num_layers - 1) * _round_up(2 * H, 8)  # layers>=1 fused [Wih;Whh]
    off["bias"] = r;  r += _round_up(num_layers + 1, 8)   # 1 bias row per layer + heads bias
    off["heads"] = r; r += _round_up(H, 8)                # fused head weights
    off["rows"] = r
    off["width"] = width
    off["n_pad"] = n_pad
    return off


# ----------------------------------------------------------------------------
# Fused Pallas kernel: wavefronted 2-layer LSTM recurrence + all heads
# ----------------------------------------------------------------------------
def _fused_lstm_heads_kernel(act_ref, w_ref, out_ref, *, T, H, L, off,
                             off_h0, off_c0):
    """act_ref : (rows, width) activations slab
           rows [0, T)           : x (lanes [0, Din), rest zero)
           rows [off_h0, off_h0+L): h0 per layer (lanes [0, H))
           rows [off_c0, off_c0+L): c0 per layer (lanes [0, H))
       w_ref  : (rows, width) weight slab, g-gate columns pre-scaled by 2
       out_ref: (1, n_pad) lane-dense heads output
    Gate order is PyTorch's (i, f, g, o); biases are pre-summed b_ih + b_hh.
    """
    four_h = 4 * H
    width = off["width"]
    n_pad = off["n_pad"]
    step2h = _round_up(2 * H, 8)

    # ---- hoisted weight loads (once, off the serial chain) -----------------
    wih0 = w_ref[off["wih0"]:off["wih0"] + width, 0:four_h]        # (width,4H)
    whh0 = w_ref[off["whh0"]:off["whh0"] + H, 0:four_h]            # (H,4H)
    b0 = w_ref[off["bias"]:off["bias"] + 1, 0:four_h]              # (1,4H)
    w_fused, b_fused = [], []
    for l in range(1, L):
        base = off["fused"] + (l - 1) * step2h
        w_fused.append(w_ref[base:base + 2 * H, 0:four_h])         # (2H,4H)
        b_fused.append(w_ref[off["bias"] + l:off["bias"] + l + 1, 0:four_h])
    w_heads = w_ref[off["heads"]:off["heads"] + H, 0:n_pad]        # (H,Np)
    b_heads = w_ref[off["bias"] + L:off["bias"] + L + 1, 0:n_pad]  # (1,Np)

    # ---- states -------------------------------------------------------------
    x = act_ref[0:T, :]                                            # (T,width)
    h = [act_ref[off_h0 + l:off_h0 + l + 1, 0:H] for l in range(L)]
    c = [act_ref[off_c0 + l:off_c0 + l + 1, 0:H] for l in range(L)]

    # Layer-0 input projection for the whole sequence: one matmul, hoisted.
    xw0 = jnp.dot(x, wih0, preferred_element_type=jnp.float32) + b0   # (T,4H)

    def cell(gates, c_prev):
        # One sigmoid over the full 4H-lane vreg (single EUP op).  The g-gate
        # pre-activation was scaled by 2 at pack time, so 2*sig-1 == tanh(z).
        a = jax.nn.sigmoid(gates)
        i = a[:, 0:H]
        f = a[:, H:2 * H]
        o = a[:, 3 * H:4 * H]
        g = 2.0 * a[:, 2 * H:3 * H] - 1.0
        c_new = f * c_prev + i * g
        h_new = o * jnp.tanh(c_new)
        return h_new, c_new

    # Wavefront: layer l step t depends only on (h[l-1] at t, h[l] at t-1),
    # so the LLO scheduler can overlap layer-0 step t+1 with layer-1 step t.
    # Full unroll is right at T=8; switch to lax.fori_loop(unroll=4..8) with an
    # (h, c) carry if T ever grows to dozens of steps.
    for t in range(T):
        gates0 = xw0[t:t + 1, :] + jnp.dot(
            h[0], whh0, preferred_element_type=jnp.float32)
        h[0], c[0] = cell(gates0, c[0])
        for l in range(1, L):
            hcat = jnp.concatenate([h[l - 1], h[l]], axis=1)       # (1,2H)
            gates = jnp.dot(hcat, w_fused[l - 1],
                            preferred_element_type=jnp.float32) + b_fused[l - 1]
            h[l], c[l] = cell(gates, c[l])

    # All n_outputs heads fused into one lane-dense matmul: (1,H)@(H,Np).
    out_ref[...] = (jnp.dot(h[L - 1], w_heads,
                            preferred_element_type=jnp.float32)
                    + b_heads).astype(out_ref.dtype)


# ----------------------------------------------------------------------------
# Wrapper
# ----------------------------------------------------------------------------
def lstm_forward(w_slab, input_seq, h0, c0, *, input_size, hidden_size,
                 num_layers, output_size, n_outputs):
    """Equivalent of LSTM.forward.

    input_seq : (T, input_size)   (PyTorch then does .unsqueeze(0) -> batch=1)
    h0, c0    : (num_layers, 1, hidden_size)
    returns   : (n_outputs, 1, output_size)
    """
    T = input_seq.shape[0]
    H = hidden_size
    L = num_layers
    off = _slab_layout(input_size, hidden_size, num_layers, output_size,
                       n_outputs)
    width = off["width"]
    n_pad = off["n_pad"]

    # Pack x, h0, c0 into a single activations slab (1 input DMA).
    off_h0 = _round_up(T, 8)
    off_c0 = off_h0 + 8
    act = jnp.zeros((off_c0 + 8, width), jnp.float32)
    act = act.at[0:T, 0:input_size].set(input_seq.astype(jnp.float32))
    act = act.at[off_h0:off_h0 + L, 0:H].set(h0[:, 0, :].astype(jnp.float32))
    act = act.at[off_c0:off_c0 + L, 0:H].set(c0[:, 0, :].astype(jnp.float32))

    kernel = functools.partial(_fused_lstm_heads_kernel, T=T, H=H, L=L,
                               off=off, off_h0=off_h0, off_c0=off_c0)
    out = pl.pallas_call(
        kernel,
        out_shape=jax.ShapeDtypeStruct((1, n_pad), jnp.float32),
        in_specs=[pl.BlockSpec(memory_space=pltpu.MemorySpace.VMEM),
                  pl.BlockSpec(memory_space=pltpu.MemorySpace.VMEM)],
        out_specs=pl.BlockSpec(memory_space=pltpu.MemorySpace.VMEM),
    )(act, w_slab)

    N = n_outputs * output_size
    return out[0, :N].reshape(n_outputs, output_size)[:, None, :]


# ----------------------------------------------------------------------------
# Deterministic raw parameters (shapes per nn.LSTM / nn.Linear)
# ----------------------------------------------------------------------------
def init_raw_params(key, input_size, hidden_size, num_layers, output_size,
                    n_outputs):
    k = 1.0 / jnp.sqrt(hidden_size)
    lstm_params = []
    for layer in range(num_layers):
        din = input_size if layer == 0 else hidden_size
        key, k1, k2, k3, k4 = jax.random.split(key, 5)
        w_ih = jax.random.uniform(k1, (4 * hidden_size, din), jnp.float32, -k, k)
        w_hh = jax.random.uniform(k2, (4 * hidden_size, hidden_size), jnp.float32, -k, k)
        b_ih = jax.random.uniform(k3, (4 * hidden_size,), jnp.float32, -k, k)
        b_hh = jax.random.uniform(k4, (4 * hidden_size,), jnp.float32, -k, k)
        lstm_params.append((w_ih, w_hh, b_ih, b_hh))

    # Only fc0..fc{n_outputs-1} contribute to the returned preds; the other
    # heads (up to fc59) are dead weight in the PyTorch module and skipped.
    heads = []
    for _ in range(n_outputs):
        key, k1, k2 = jax.random.split(key, 3)
        w = jax.random.uniform(k1, (output_size, hidden_size), jnp.float32, -k, k)
        b = jax.random.uniform(k2, (output_size,), jnp.float32, -k, k)
        heads.append((w, b))
    return {"lstm": lstm_params, "heads": heads}


# ----------------------------------------------------------------------------
# Pack raw params into the single weight slab (with g-gate sigmoid folding)
# ----------------------------------------------------------------------------
def pack_params(raw, input_size, hidden_size, num_layers, output_size,
                n_outputs):
    H = hidden_size
    four_h = 4 * H
    off = _slab_layout(input_size, hidden_size, num_layers, output_size,
                       n_outputs)
    width = off["width"]
    N = n_outputs * output_size

    def fold_w(w_t):      # (K, 4H): scale g-gate output columns by 2
        return w_t.at[:, 2 * H:3 * H].multiply(2.0)

    def fold_b(b):        # (4H,)
        return b.at[2 * H:3 * H].multiply(2.0)

    slab = jnp.zeros((off["rows"], width), jnp.float32)

    w_ih0, w_hh0, b_ih0, b_hh0 = raw["lstm"][0]
    slab = slab.at[off["wih0"]:off["wih0"] + input_size, 0:four_h].set(
        fold_w(w_ih0.T))
    slab = slab.at[off["whh0"]:off["whh0"] + H, 0:four_h].set(fold_w(w_hh0.T))
    slab = slab.at[off["bias"], 0:four_h].set(fold_b(b_ih0 + b_hh0))

    step2h = _round_up(2 * H, 8)
    for l in range(1, num_layers):
        w_ih, w_hh, b_ih, b_hh = raw["lstm"][l]
        fused = jnp.concatenate([w_ih.T, w_hh.T], axis=0)       # (2H, 4H)
        base = off["fused"] + (l - 1) * step2h
        slab = slab.at[base:base + 2 * H, 0:four_h].set(fold_w(fused))
        slab = slab.at[off["bias"] + l, 0:four_h].set(fold_b(b_ih + b_hh))

    w_heads = jnp.concatenate([w.T for (w, _) in raw["heads"]], axis=1)  # (H,N)
    b_heads = jnp.concatenate([b for (_, b) in raw["heads"]], axis=0)    # (N,)
    slab = slab.at[off["heads"]:off["heads"] + H, 0:N].set(w_heads)
    slab = slab.at[off["bias"] + num_layers, 0:N].set(b_heads)
    return slab


# ----------------------------------------------------------------------------
# Pure-JAX reference on the RAW (unfolded) parameterization
# ----------------------------------------------------------------------------
def lstm_forward_ref(raw, input_seq, h0, c0, n_outputs, output_size):
    x = input_seq.astype(jnp.float32)
    for layer, (w_ih, w_hh, b_ih, b_hh) in enumerate(raw["lstm"]):
        H = w_hh.shape[1]
        h = h0[layer].astype(jnp.float32)
        c = c0[layer].astype(jnp.float32)
        outs = []
        for t in range(x.shape[0]):
            gates = x[t:t + 1] @ w_ih.T + h @ w_hh.T + b_ih + b_hh
            i = jax.nn.sigmoid(gates[:, 0:H])
            f = jax.nn.sigmoid(gates[:, H:2 * H])
            g = jnp.tanh(gates[:, 2 * H:3 * H])
            o = jax.nn.sigmoid(gates[:, 3 * H:4 * H])
            c = f * c + i * g
            h = o * jnp.tanh(c)
            outs.append(h)
        x = jnp.concatenate(outs, axis=0)
    h_last = x[-1:, :]
    preds = [h_last @ w.T + b for (w, b) in raw["heads"]]
    return jnp.stack(preds, axis=0)          # (n_outputs, 1, output_size)


# ----------------------------------------------------------------------------
if __name__ == "__main__":
    input_size = 4
    hidden_size = 32
    num_layers = 2
    output_size = 4
    batch_size = 1          # forward() unsqueezes a single sequence -> batch=1
    n_outputs = 6
    seq_len = 8

    key = jax.random.PRNGKey(0)
    key, kp, kx, kh, kc = jax.random.split(key, 5)

    raw = init_raw_params(kp, input_size, hidden_size, num_layers,
                          output_size, n_outputs)
    w_slab = pack_params(raw, input_size, hidden_size, num_layers,
                         output_size, n_outputs)

    input_seq = jax.random.normal(kx, (seq_len, input_size), jnp.float32)
    # torch.randn h_0/c_0 made deterministic via PRNGKey.
    h0 = jax.random.normal(kh, (num_layers, batch_size, hidden_size), jnp.float32)
    c0 = jax.random.normal(kc, (num_layers, batch_size, hidden_size), jnp.float32)

    fwd = jax.jit(functools.partial(
        lstm_forward, input_size=input_size, hidden_size=hidden_size,
        num_layers=num_layers, output_size=output_size, n_outputs=n_outputs))
    preds = fwd(w_slab, input_seq, h0, c0)
    preds = jax.block_until_ready(preds)
    assert preds.shape == (n_outputs, batch_size, output_size), preds.shape

    ref = lstm_forward_ref(raw, input_seq, h0, c0, n_outputs, output_size)
    assert jnp.allclose(preds, ref, atol=1e-3, rtol=1e-3), \
        float(jnp.max(jnp.abs(preds - ref)))

    print("KERNEL_OK")
</pallas_src>

<mosaic_0001>
module attributes {stable_mosaic.version = 11 : i64} {
  func.func @_fused_lstm_heads_kernel(%arg0: memref<24x128xf32, #tpu.memory_space<vmem>>, %arg1: memref<264x128xf32, #tpu.memory_space<vmem>>, %arg2: memref<1x128xf32, #tpu.memory_space<vmem>>) attributes {dimension_semantics = [], scalar_prefetch = 0 : i64, scratch_operands = 0 : i64, tpu.core_type = #tpu.core_type<tc>} {
    %c0 = arith.constant 0 : index
    %c0_0 = arith.constant 0 : index
    %0 = vector.load %arg1[%c0, %c0_0] : memref<264x128xf32, #tpu.memory_space<vmem>>, vector<128x128xf32>
    %c128 = arith.constant 128 : index
    %c0_1 = arith.constant 0 : index
    %1 = vector.load %arg1[%c128, %c0_1] : memref<264x128xf32, #tpu.memory_space<vmem>>, vector<32x128xf32>
    %c224 = arith.constant 224 : index
    %c0_2 = arith.constant 0 : index
    %2 = vector.load %arg1[%c224, %c0_2] : memref<264x128xf32, #tpu.memory_space<vmem>>, vector<1x128xf32>
    %c160 = arith.constant 160 : index
    %c0_3 = arith.constant 0 : index
    %3 = vector.load %arg1[%c160, %c0_3] : memref<264x128xf32, #tpu.memory_space<vmem>>, vector<64x128xf32>
    %c225 = arith.constant 225 : index
    %c0_4 = arith.constant 0 : index
    %4 = vector.load %arg1[%c225, %c0_4] : memref<264x128xf32, #tpu.memory_space<vmem>>, vector<1x128xf32>
    %c232 = arith.constant 232 : index
    %c0_5 = arith.constant 0 : index
    %5 = vector.load %arg1[%c232, %c0_5] : memref<264x128xf32, #tpu.memory_space<vmem>>, vector<32x128xf32>
    %c226 = arith.constant 226 : index
    %c0_6 = arith.constant 0 : index
    %6 = vector.load %arg1[%c226, %c0_6] : memref<264x128xf32, #tpu.memory_space<vmem>>, vector<1x128xf32>
    %c0_7 = arith.constant 0 : index
    %c0_8 = arith.constant 0 : index
    %7 = vector.load %arg0[%c0_7, %c0_8] : memref<24x128xf32, #tpu.memory_space<vmem>>, vector<8x128xf32>
    %c8 = arith.constant 8 : index
    %c0_9 = arith.constant 0 : index
    %8 = vector.load %arg0[%c8, %c0_9] : memref<24x128xf32, #tpu.memory_space<vmem>>, vector<1x32xf32>
    %c9 = arith.constant 9 : index
    %c0_10 = arith.constant 0 : index
    %9 = vector.load %arg0[%c9, %c0_10] : memref<24x128xf32, #tpu.memory_space<vmem>>, vector<1x32xf32>
    %c16 = arith.constant 16 : index
    %c0_11 = arith.constant 0 : index
    %10 = vector.load %arg0[%c16, %c0_11] : memref<24x128xf32, #tpu.memory_space<vmem>>, vector<1x32xf32>
    %c17 = arith.constant 17 : index
    %c0_12 = arith.constant 0 : index
    %11 = vector.load %arg0[%c17, %c0_12] : memref<24x128xf32, #tpu.memory_space<vmem>>, vector<1x32xf32>
    %cst = arith.constant dense<0.000000e+00> : vector<8x128xf32>
    %12 = tpu.matmul %7, %0, %cst {dimension_numbers = #tpu.dot_dimension_numbers<[1], [0], [0], [1], [0, 0, 1, 1], [], []>} : vector<8x128xf32>, vector<128x128xf32>, vector<8x128xf32> -> vector<8x128xf32>
    %13 = vector.broadcast %2 : vector<1x128xf32> to vector<8x128xf32>
    %14 = arith.addf %12, %13 : vector<8x128xf32>
    %15 = vector.extract_strided_slice %14 {offsets = [0, 0], sizes = [1, 128], strides = [1, 1]} : vector<8x128xf32> to vector<1x128xf32>
    %cst_13 = arith.constant dense<0.000000e+00> : vector<1x128xf32>
    %16 = tpu.matmul %8, %1, %cst_13 {dimension_numbers = #tpu.dot_dimension_numbers<[1], [0], [0], [1], [0, 0, 1, 1], [], []>} : vector<1x32xf32>, vector<32x128xf32>, vector<1x128xf32> -> vector<1x128xf32>
    %17 = arith.addf %15, %16 : vector<1x128xf32>
    %18 = arith.negf %17 : vector<1x128xf32>
    %19 = math.exp %18 : vector<1x128xf32>
    %cst_14 = arith.constant 1.000000e+00 : f32
    %20 = vector.broadcast %cst_14 : f32 to vector<1x128xf32>
    %21 = arith.addf %20, %19 : vector<1x128xf32>
    %22 = arith.divf %20, %21 : vector<1x128xf32>
    %23 = vector.extract_strided_slice %22 {offsets = [0, 0], sizes = [1, 32], strides = [1, 1]} : vector<1x128xf32> to vector<1x32xf32>
    %24 = vector.extract_strided_slice %22 {offsets = [0, 32], sizes = [1, 32], strides = [1, 1]} : vector<1x128xf32> to vector<1x32xf32>
    %25 = vector.extract_strided_slice %22 {offsets = [0, 96], sizes = [1, 32], strides = [1, 1]} : vector<1x128xf32> to vector<1x32xf32>
    %26 = vector.extract_strided_slice %22 {offsets = [0, 64], sizes = [1, 32], strides = [1, 1]} : vector<1x128xf32> to vector<1x32xf32>
    %cst_15 = arith.constant 2.000000e+00 : f32
    %27 = vector.broadcast %cst_15 : f32 to vector<1x32xf32>
    %28 = arith.mulf %27, %26 : vector<1x32xf32>
    %cst_16 = arith.constant 1.000000e+00 : f32
    %29 = vector.broadcast %cst_16 : f32 to vector<1x32xf32>
    %30 = arith.subf %28, %29 : vector<1x32xf32>
    %31 = arith.mulf %24, %10 : vector<1x32xf32>
    %32 = arith.mulf %23, %30 : vector<1x32xf32>
    %33 = arith.addf %31, %32 : vector<1x32xf32>
    %34 = math.tanh %33 : vector<1x32xf32>
    %35 = arith.mulf %25, %34 : vector<1x32xf32>
    %36 = tpu.concatenate %35, %9 in 1 : vector<1x32xf32>, vector<1x32xf32> -> vector<1x64xf32>
    %cst_17 = arith.constant dense<0.000000e+00> : vector<1x128xf32>
    %37 = tpu.matmul %36, %3, %cst_17 {dimension_numbers = #tpu.dot_dimension_numbers<[1], [0], [0], [1], [0, 0, 1, 1], [], []>} : vector<1x64xf32>, vector<64x128xf32>, vector<1x128xf32> -> vector<1x128xf32>
    %38 = arith.addf %37, %4 : vector<1x128xf32>
    %39 = arith.negf %38 : vector<1x128xf32>
    %40 = math.exp %39 : vector<1x128xf32>
    %cst_18 = arith.constant 1.000000e+00 : f32
    %41 = vector.broadcast %cst_18 : f32 to vector<1x128xf32>
    %42 = arith.addf %41, %40 : vector<1x128xf32>
    %43 = arith.divf %41, %42 : vector<1x128xf32>
    %44 = vector.extract_strided_slice %43 {offsets = [0, 0], sizes = [1, 32], strides = [1, 1]} : vector<1x128xf32> to vector<1x32xf32>
    %45 = vector.extract_strided_slice %43 {offsets = [0, 32], sizes = [1, 32], strides = [1, 1]} : vector<1x128xf32> to vector<1x32xf32>
    %46 = vector.extract_strided_slice %43 {offsets = [0, 96], sizes = [1, 32], strides = [1, 1]} : vector<1x128xf32> to vector<1x32xf32>
    %47 = vector.extract_strided_slice %43 {offsets = [0, 64], sizes = [1, 32], strides = [1, 1]} : vector<1x128xf32> to vector<1x32xf32>
    %cst_19 = arith.constant 2.000000e+00 : f32
    %48 = vector.broadcast %cst_19 : f32 to vector<1x32xf32>
    %49 = arith.mulf %48, %47 : vector<1x32xf32>
    %cst_20 = arith.constant 1.000000e+00 : f32
    %50 = vector.broadcast %cst_20 : f32 to vector<1x32xf32>
    %51 = arith.subf %49, %50 : vector<1x32xf32>
    %52 = arith.mulf %45, %11 : vector<1x32xf32>
    %53 = arith.mulf %44, %51 : vector<1x32xf32>
    %54 = arith.addf %52, %53 : vector<1x32xf32>
    %55 = math.tanh %54 : vector<1x32xf32>
    %56 = arith.mulf %46, %55 : vector<1x32xf32>
    %57 = vector.extract_strided_slice %14 {offsets = [1, 0], sizes = [1, 128], strides = [1, 1]} : vector<8x128xf32> to vector<1x128xf32>
    %cst_21 = arith.constant dense<0.000000e+00> : vector<1x128xf32>
    %58 = tpu.matmul %35, %1, %cst_21 {dimension_numbers = #tpu.dot_dimension_numbers<[1], [0], [0], [1], [0, 0, 1, 1], [], []>} : vector<1x32xf32>, vector<32x128xf32>, vector<1x128xf32> -> vector<1x128xf32>
    %59 = arith.addf %57, %58 : vector<1x128xf32>
    %60 = arith.negf %59 : vector<1x128xf32>
    %61 = math.exp %60 : vector<1x128xf32>
    %cst_22 = arith.constant 1.000000e+00 : f32
    %62 = vector.broadcast %cst_22 : f32 to vector<1x128xf32>
    %63 = arith.addf %62, %61 : vector<1x128xf32>
    %64 = arith.divf %62, %63 : vector<1x128xf32>
    %65 = vector.extract_strided_slice %64 {offsets = [0, 0], sizes = [1, 32], strides = [1, 1]} : vector<1x128xf32> to vector<1x32xf32>
    %66 = vector.extract_strided_slice %64 {offsets = [0, 32], sizes = [1, 32], strides = [1, 1]} : vector<1x128xf32> to vector<1x32xf32>
    %67 = vector.extract_strided_slice %64 {offsets = [0, 96], sizes = [1, 32], strides = [1, 1]} : vector<1x128xf32> to vector<1x32xf32>
    %68 = vector.extract_strided_slice %64 {offsets = [0, 64], sizes = [1, 32], strides = [1, 1]} : vector<1x128xf32> to vector<1x32xf32>
    %cst_23 = arith.constant 2.000000e+00 : f32
    %69 = vector.broadcast %cst_23 : f32 to vector<1x32xf32>
    %70 = arith.mulf %69, %68 : vector<1x32xf32>
    %cst_24 = arith.constant 1.000000e+00 : f32
    %71 = vector.broadcast %cst_24 : f32 to vector<1x32xf32>
    %72 = arith.subf %70, %71 : vector<1x32xf32>
    %73 = arith.mulf %66, %33 : vector<1x32xf32>
    %74 = arith.mulf %65, %72 : vector<1x32xf32>
    %75 = arith.addf %73, %74 : vector<1x32xf32>
    %76 = math.tanh %75 : vector<1x32xf32>
    %77 = arith.mulf %67, %76 : vector<1x32xf32>
    %78 = tpu.concatenate %77, %56 in 1 : vector<1x32xf32>, vector<1x32xf32> -> vector<1x64xf32>
    %cst_25 = arith.constant dense<0.000000e+00> : vector<1x128xf32>
    %79 = tpu.matmul %78, %3, %cst_25 {dimension_numbers = #tpu.dot_dimension_numbers<[1], [0], [0], [1], [0, 0, 1, 1], [], []>} : vector<1x64xf32>, vector<64x128xf32>, vector<1x128xf32> -> vector<1x128xf32>
    %80 = arith.addf %79, %4 : vector<1x128xf32>
    %81 = arith.negf %80 : vector<1x128xf32>
    %82 = math.exp %81 : vector<1x128xf32>
    %cst_26 = arith.constant 1.000000e+00 : f32
    %83 = vector.broadcast %cst_26 : f32 to vector<1x128xf32>
    %84 = arith.addf %83, %82 : vector<1x128xf32>
    %85 = arith.divf %83, %84 : vector<1x128xf32>
    %86 = vector.extract_strided_slice %85 {offsets = [0, 0], sizes = [1, 32], strides = [1, 1]} : vector<1x128xf32> to vector<1x32xf32>
    %87 = vector.extract_strided_slice %85 {offsets = [0, 32], sizes = [1, 32], strides = [1, 1]} : vector<1x128xf32> to vector<1x32xf32>
    %88 = vector.extract_strided_slice %85 {offsets = [0, 96], sizes = [1, 32], strides = [1, 1]} : vector<1x128xf32> to vector<1x32xf32>
    %89 = vector.extract_strided_slice %85 {offsets = [0, 64], sizes = [1, 32], strides = [1, 1]} : vector<1x128xf32> to vector<1x32xf32>
    %cst_27 = arith.constant 2.000000e+00 : f32
    %90 = vector.broadcast %cst_27 : f32 to vector<1x32xf32>
    %91 = arith.mulf %90, %89 : vector<1x32xf32>
    %cst_28 = arith.constant 1.000000e+00 : f32
    %92 = vector.broadcast %cst_28 : f32 to vector<1x32xf32>
    %93 = arith.subf %91, %92 : vector<1x32xf32>
    %94 = arith.mulf %87, %54 : vector<1x32xf32>
    %95 = arith.mulf %86, %93 : vector<1x32xf32>
    %96 = arith.addf %94, %95 : vector<1x32xf32>
    %97 = math.tanh %96 : vector<1x32xf32>
    %98 = arith.mulf %88, %97 : vector<1x32xf32>
    %99 = vector.extract_strided_slice %14 {offsets = [2, 0], sizes = [1, 128], strides = [1, 1]} : vector<8x128xf32> to vector<1x128xf32>
    %cst_29 = arith.constant dense<0.000000e+00> : vector<1x128xf32>
    %100 = tpu.matmul %77, %1, %cst_29 {dimension_numbers = #tpu.dot_dimension_numbers<[1], [0], [0], [1], [0, 0, 1, 1], [], []>} : vector<1x32xf32>, vector<32x128xf32>, vector<1x128xf32> -> vector<1x128xf32>
    %101 = arith.addf %99, %100 : vector<1x128xf32>
    %102 = arith.negf %101 : vector<1x128xf32>
    %103 = math.exp %102 : vector<1x128xf32>
    %cst_30 = arith.constant 1.000000e+00 : f32
    %104 = vector.broadcast %cst_30 : f32 to vector<1x128xf32>
    %105 = arith.addf %104, %103 : vector<1x128xf32>
    %106 = arith.divf %104, %105 : vector<1x128xf32>
    %107 = vector.extract_strided_slice %106 {offsets = [0, 0], sizes = [1, 32], strides = [1, 1]} : vector<1x128xf32> to vector<1x32xf32>
    %108 = vector.extract_strided_slice %106 {offsets = [0, 32], sizes = [1, 32], strides = [1, 1]} : vector<1x128xf32> to vector<1x32xf32>
    %109 = vector.extract_strided_slice %106 {offsets = [0, 96], sizes = [1, 32], strides = [1, 1]} : vector<1x128xf32> to vector<1x32xf32>
    %110 = vector.extract_strided_slice %106 {offsets = [0, 64], sizes = [1, 32], strides = [1, 1]} : vector<1x128xf32> to vector<1x32xf32>
    %cst_31 = arith.constant 2.000000e+00 : f32
    %111 = vector.broadcast %cst_31 : f32 to vector<1x32xf32>
    %112 = arith.mulf %111, %110 : vector<1x32xf32>
    %cst_32 = arith.constant 1.000000e+00 : f32
    %113 = vector.broadcast %cst_32 : f32 to vector<1x32xf32>
    %114 = arith.subf %112, %113 : vector<1x32xf32>
    %115 = arith.mulf %108, %75 : vector<1x32xf32>
    %116 = arith.mulf %107, %114 : vector<1x32xf32>
    %117 = arith.addf %115, %116 : vector<1x32xf32>
    %118 = math.tanh %117 : vector<1x32xf32>
    %119 = arith.mulf %109, %118 : vector<1x32xf32>
    %120 = tpu.concatenate %119, %98 in 1 : vector<1x32xf32>, vector<1x32xf32> -> vector<1x64xf32>
    %cst_33 = arith.constant dense<0.000000e+00> : vector<1x128xf32>
    %121 = tpu.matmul %120, %3, %cst_33 {dimension_numbers = #tpu.dot_dimension_numbers<[1], [0], [0], [1], [0, 0, 1, 1], [], []>} : vector<1x64xf32>, vector<64x128xf32>, vector<1x128xf32> -> vector<1x128xf32>
    %122 = arith.addf %121, %4 : vector<1x128xf32>
    %123 = arith.negf %122 : vector<1x128xf32>
    %124 = math.exp %123 : vector<1x128xf32>
    %cst_34 = arith.constant 1.000000e+00 : f32
    %125 = vector.broadcast %cst_34 : f32 to vector<1x128xf32>
    %126 = arith.addf %125, %124 : vector<1x128xf32>
    %127 = arith.divf %125, %126 : vector<1x128xf32>
    %128 = vector.extract_strided_slice %127 {offsets = [0, 0], sizes = [1, 32], strides = [1, 1]} : vector<1x128xf32> to vector<1x32xf32>
    %129 = vector.extract_strided_slice %127 {offsets = [0, 32], sizes = [1, 32], strides = [1, 1]} : vector<1x128xf32> to vector<1x32xf32>
    %130 = vector.extract_strided_slice %127 {offsets = [0, 96], sizes = [1, 32], strides = [1, 1]} : vector<1x128xf32> to vector<1x32xf32>
    %131 = vector.extract_strided_slice %127 {offsets = [0, 64], sizes = [1, 32], strides = [1, 1]} : vector<1x128xf32> to vector<1x32xf32>
    %cst_35 = arith.constant 2.000000e+00 : f32
    %132 = vector.broadcast %cst_35 : f32 to vector<1x32xf32>
    %133 = arith.mulf %132, %131 : vector<1x32xf32>
    %cst_36 = arith.constant 1.000000e+00 : f32
    %134 = vector.broadcast %cst_36 : f32 to vector<1x32xf32>
    %135 = arith.subf %133, %134 : vector<1x32xf32>
    %136 = arith.mulf %129, %96 : vector<1x32xf32>
    %137 = arith.mulf %128, %135 : vector<1x32xf32>
    %138 = arith.addf %136, %137 : vector<1x32xf32>
    %139 = math.tanh %138 : vector<1x32xf32>
    %140 = arith.mulf %130, %139 : vector<1x32xf32>
    %141 = vector.extract_strided_slice %14 {offsets = [3, 0], sizes = [1, 128], strides = [1, 1]} : vector<8x128xf32> to vector<1x128xf32>
    %cst_37 = arith.constant dense<0.000000e+00> : vector<1x128xf32>
    %142 = tpu.matmul %119, %1, %cst_37 {dimension_numbers = #tpu.dot_dimension_numbers<[1], [0], [0], [1], [0, 0, 1, 1], [], []>} : vector<1x32xf32>, vector<32x128xf32>, vector<1x128xf32> -> vector<1x128xf32>
    %143 = arith.addf %141, %142 : vector<1x128xf32>
    %144 = arith.negf %143 : vector<1x128xf32>
    %145 = math.exp %144 : vector<1x128xf32>
    %cst_38 = arith.constant 1.000000e+00 : f32
    %146 = vector.broadcast %cst_38 : f32 to vector<1x128xf32>
    %147 = arith.addf %146, %145 : vector<1x128xf32>
    %148 = arith.divf %146, %147 : vector<1x128xf32>
    %149 = vector.extract_strided_slice %148 {offsets = [0, 0], sizes = [1, 32], strides = [1, 1]} : vector<1x128xf32> to vector<1x32xf32>
    %150 = vector.extract_strided_slice %148 {offsets = [0, 32], sizes = [1, 32], strides = [1, 1]} : vector<1x128xf32> to vector<1x32xf32>
    %151 = vector.extract_strided_slice %148 {offsets = [0, 96], sizes = [1, 32], strides = [1, 1]} : vector<1x128xf32> to vector<1x32xf32>
    %152 = vector.extract_strided_slice %148 {offsets = [0, 64], sizes = [1, 32], strides = [1, 1]} : vector<1x128xf32> to vector<1x32xf32>
    %cst_39 = arith.constant 2.000000e+00 : f32
    %153 = vector.broadcast %cst_39 : f32 to vector<1x32xf32>
    %154 = arith.mulf %153, %152 : vector<1x32xf32>
    %cst_40 = arith.constant 1.000000e+00 : f32
    %155 = vector.broadcast %cst_40 : f32 to vector<1x32xf32>
    %156 = arith.subf %154, %155 : vector<1x32xf32>
    %157 = arith.mulf %150, %117 : vector<1x32xf32>
    %158 = arith.mulf %149, %156 : vector<1x32xf32>
    %159 = arith.addf %157, %158 : vector<1x32xf32>
    %160 = math.tanh %159 : vector<1x32xf32>
    %161 = arith.mulf %151, %160 : vector<1x32xf32>
    %162 = tpu.concatenate %161, %140 in 1 : vector<1x32xf32>, vector<1x32xf32> -> vector<1x64xf32>
    %cst_41 = arith.constant dense<0.000000e+00> : vector<1x128xf32>
    %163 = tpu.matmul %162, %3, %cst_41 {dimension_numbers = #tpu.dot_dimension_numbers<[1], [0], [0], [1], [0, 0, 1, 1], [], []>} : vector<1x64xf32>, vector<64x128xf32>, vector<1x128xf32> -> vector<1x128xf32>
    %164 = arith.addf %163, %4 : vector<1x128xf32>
    %165 = arith.negf %164 : vector<1x128xf32>
    %166 = math.exp %165 : vector<1x128xf32>
    %cst_42 = arith.constant 1.000000e+00 : f32
    %167 = vector.broadcast %cst_42 : f32 to vector<1x128xf32>
    %168 = arith.addf %167, %166 : vector<1x128xf32>
    %169 = arith.divf %167, %168 : vector<1x128xf32>
    %170 = vector.extract_strided_slice %169 {offsets = [0, 0], sizes = [1, 32], strides = [1, 1]} : vector<1x128xf32> to vector<1x32xf32>
    %171 = vector.extract_strided_slice %169 {offsets = [0, 32], sizes = [1, 32], strides = [1, 1]} : vector<1x128xf32> to vector<1x32xf32>
    %172 = vector.extract_strided_slice %169 {offsets = [0, 96], sizes = [1, 32], strides = [1, 1]} : vector<1x128xf32> to vector<1x32xf32>
    %173 = vector.extract_strided_slice %169 {offsets = [0, 64], sizes = [1, 32], strides = [1, 1]} : vector<1x128xf32> to vector<1x32xf32>
    %cst_43 = arith.constant 2.000000e+00 : f32
    %174 = vector.broadcast %cst_43 : f32 to vector<1x32xf32>
    %175 = arith.mulf %174, %173 : vector<1x32xf32>
    %cst_44 = arith.constant 1.000000e+00 : f32
    %176 = vector.broadcast %cst_44 : f32 to vector<1x32xf32>
    %177 = arith.subf %175, %176 : vector<1x32xf32>
    %178 = arith.mulf %171, %138 : vector<1x32xf32>
    %179 = arith.mulf %170, %177 : vector<1x32xf32>
    %180 = arith.addf %178, %179 : vector<1x32xf32>
    %181 = math.tanh %180 : vector<1x32xf32>
    %182 = arith.mulf %172, %181 : vector<1x32xf32>
    %183 = vector.extract_strided_slice %14 {offsets = [4, 0], sizes = [1, 128], strides = [1, 1]} : vector<8x128xf32> to vector<1x128xf32>
    %cst_45 = arith.constant dense<0.000000e+00> : vector<1x128xf32>
    %184 = tpu.matmul %161, %1, %cst_45 {dimension_numbers = #tpu.dot_dimension_numbers<[1], [0], [0], [1], [0, 0, 1, 1], [], []>} : vector<1x32xf32>, vector<32x128xf32>, vector<1x128xf32> -> vector<1x128xf32>
    %185 = arith.addf %183, %184 : vector<1x128xf32>
    %186 = arith.negf %185 : vector<1x128xf32>
    %187 = math.exp %186 : vector<1x128xf32>
    %cst_46 = arith.constant 1.000000e+00 : f32
    %188 = vector.broadcast %cst_46 : f32 to vector<1x128xf32>
    %189 = arith.addf %188, %187 : vector<1x128xf32>
    %190 = arith.divf %188, %189 : vector<1x128xf32>
    %191 = vector.extract_strided_slice %190 {offsets = [0, 0], sizes = [1, 32], strides = [1, 1]} : vector<1x128xf32> to vector<1x32xf32>
    %192 = vector.extract_strided_slice %190 {offsets = [0, 32], sizes = [1, 32], strides = [1, 1]} : vector<1x128xf32> to vector<1x32xf32>
    %193 = vector.extract_strided_slice %190 {offsets = [0, 96], sizes = [1, 32], strides = [1, 1]} : vector<1x128xf32> to vector<1x32xf32>
    %194 = vector.extract_strided_slice %190 {offsets = [0, 64], sizes = [1, 32], strides = [1, 1]} : vector<1x128xf32> to vector<1x32xf32>
    %cst_47 = arith.constant 2.000000e+00 : f32
    %195 = vector.broadcast %cst_47 : f32 to vector<1x32xf32>
    %196 = arith.mulf %195, %194 : vector<1x32xf32>
    %cst_48 = arith.constant 1.000000e+00 : f32
    %197 = vector.broadcast %cst_48 : f32 to vector<1x32xf32>
    %198 = arith.subf %196, %197 : vector<1x32xf32>
    %199 = arith.mulf %192, %159 : vector<1x32xf32>
    %200 = arith.mulf %191, %198 : vector<1x32xf32>
    %201 = arith.addf %199, %200 : vector<1x32xf32>
    %202 = math.tanh %201 : vector<1x32xf32>
    %203 = arith.mulf %193, %202 : vector<1x32xf32>
    %204 = tpu.concatenate %203, %182 in 1 : vector<1x32xf32>, vector<1x32xf32> -> vector<1x64xf32>
    %cst_49 = arith.constant dense<0.000000e+00> : vector<1x128xf32>
    %205 = tpu.matmul %204, %3, %cst_49 {dimension_numbers = #tpu.dot_dimension_numbers<[1], [0], [0], [1], [0, 0, 1, 1], [], []>} : vector<1x64xf32>, vector<64x128xf32>, vector<1x128xf32> -> vector<1x128xf32>
    %206 = arith.addf %205, %4 : vector<1x128xf32>
    %207 = arith.negf %206 : vector<1x128xf32>
    %208 = math.exp %207 : vector<1x128xf32>
    %cst_50 = arith.constant 1.000000e+00 : f32
    %209 = vector.broadcast %cst_50 : f32 to vector<1x128xf32>
    %210 = arith.addf %209, %208 : vector<1x128xf32>
    %211 = arith.divf %209, %210 : vector<1x128xf32>
    %212 = vector.extract_strided_slice %211 {offsets = [0, 0], sizes = [1, 32], strides = [1, 1]} : vector<1x128xf32> to vector<1x32xf32>
    %213 = vector.extract_strided_slice %211 {offsets = [0, 32], sizes = [1, 32], strides = [1, 1]} : vector<1x128xf32> to vector<1x32xf32>
    %214 = vector.extract_strided_slice %211 {offsets = [0, 96], sizes = [1, 32], strides = [1, 1]} : vector<1x128xf32> to vector<1x32xf32>
    %215 = vector.extract_strided_slice %211 {offsets = [0, 64], sizes = [1, 32], strides = [1, 1]} : vector<1x128xf32> to vector<1x32xf32>
    %cst_51 = arith.constant 2.000000e+00 : f32
    %216 = vector.broadcast %cst_51 : f32 to vector<1x32xf32>
    %217 = arith.mulf %216, %215 : vector<1x32xf32>
    %cst_52 = arith.constant 1.000000e+00 : f32
    %218 = vector.broadcast %cst_52 : f32 to vector<1x32xf32>
    %219 = arith.subf %217, %218 : vector<1x32xf32>
    %220 = arith.mulf %213, %180 : vector<1x32xf32>
    %221 = arith.mulf %212, %219 : vector<1x32xf32>
    %222 = arith.addf %220, %221 : vector<1x32xf32>
    %223 = math.tanh %222 : vector<1x32xf32>
    %224 = arith.mulf %214, %223 : vector<1x32xf32>
    %225 = vector.extract_strided_slice %14 {offsets = [5, 0], sizes = [1, 128], strides = [1, 1]} : vector<8x128xf32> to vector<1x128xf32>
    %cst_53 = arith.constant dense<0.000000e+00> : vector<1x128xf32>
    %226 = tpu.matmul %203, %1, %cst_53 {dimension_numbers = #tpu.dot_dimension_numbers<[1], [0], [0], [1], [0, 0, 1, 1], [], []>} : vector<1x32xf32>, vector<32x128xf32>, vector<1x128xf32> -> vector<1x128xf32>
    %227 = arith.addf %225, %226 : vector<1x128xf32>
    %228 = arith.negf %227 : vector<1x128xf32>
    %229 = math.exp %228 : vector<1x128xf32>
    %cst_54 = arith.constant 1.000000e+00 : f32
    %230 = vector.broadcast %cst_54 : f32 to vector<1x128xf32>
    %231 = arith.addf %230, %229 : vector<1x128xf32>
    %232 = arith.divf %230, %231 : vector<1x128xf32>
    %233 = vector.extract_strided_slice %232 {offsets = [0, 0], sizes = [1, 32], strides = [1, 1]} : vector<1x128xf32> to vector<1x32xf32>
    %234 = vector.extract_strided_slice %232 {offsets = [0, 32], sizes = [1, 32], strides = [1, 1]} : vector<1x128xf32> to vector<1x32xf32>
    %235 = vector.extract_strided_slice %232 {offsets = [0, 96], sizes = [1, 32], strides = [1, 1]} : vector<1x128xf32> to vector<1x32xf32>
    %236 = vector.extract_strided_slice %232 {offsets = [0, 64], sizes = [1, 32], strides = [1, 1]} : vector<1x128xf32> to vector<1x32xf32>
    %cst_55 = arith.constant 2.000000e+00 : f32
    %237 = vector.broadcast %cst_55 : f32 to vector<1x32xf32>
    %238 = arith.mulf %237, %236 : vector<1x32xf32>
    %cst_56 = arith.constant 1.000000e+00 : f32
    %239 = vector.broadcast %cst_56 : f32 to vector<1x32xf32>
    %240 = arith.subf %238, %239 : vector<1x32xf32>
    %241 = arith.mulf %234, %201 : vector<1x32xf32>
    %242 = arith.mulf %233, %240 : vector<1x32xf32>
    %243 = arith.addf %241, %242 : vector<1x32xf32>
    %244 = math.tanh %243 : vector<1x32xf32>
    %245 = arith.mulf %235, %244 : vector<1x32xf32>
    %246 = tpu.concatenate %245, %224 in 1 : vector<1x32xf32>, vector<1x32xf32> -> vector<1x64xf32>
    %cst_57 = arith.constant dense<0.000000e+00> : vector<1x128xf32>
    %247 = tpu.matmul %246, %3, %cst_57 {dimension_numbers = #tpu.dot_dimension_numbers<[1], [0], [0], [1], [0, 0, 1, 1], [], []>} : vector<1x64xf32>, vector<64x128xf32>, vector<1x128xf32> -> vector<1x128xf32>
    %248 = arith.addf %247, %4 : vector<1x128xf32>
    %249 = arith.negf %248 : vector<1x128xf32>
    %250 = math.exp %249 : vector<1x128xf32>
    %cst_58 = arith.constant 1.000000e+00 : f32
    %251 = vector.broadcast %cst_58 : f32 to vector<1x128xf32>
    %252 = arith.addf %251, %250 : vector<1x128xf32>
    %253 = arith.divf %251, %252 : vector<1x128xf32>
    %254 = vector.extract_strided_slice %253 {offsets = [0, 0], sizes = [1, 32], strides = [1, 1]} : vector<1x128xf32> to vector<1x32xf32>
    %255 = vector.extract_strided_slice %253 {offsets = [0, 32], sizes = [1, 32], strides = [1, 1]} : vector<1x128xf32> to vector<1x32xf32>
    %256 = vector.extract_strided_slice %253 {offsets = [0, 96], sizes = [1, 32], strides = [1, 1]} : vector<1x128xf32> to vector<1x32xf32>
    %257 = vector.extract_strided_slice %253 {offsets = [0, 64], sizes = [1, 32], strides = [1, 1]} : vector<1x128xf32> to vector<1x32xf32>
    %cst_59 = arith.constant 2.000000e+00 : f32
    %258 = vector.broadcast %cst_59 : f32 to vector<1x32xf32>
    %259 = arith.mulf %258, %257 : vector<1x32xf32>
    %cst_60 = arith.constant 1.000000e+00 : f32
    %260 = vector.broadcast %cst_60 : f32 to vector<1x32xf32>
    %261 = arith.subf %259, %260 : vector<1x32xf32>
    %262 = arith.mulf %255, %222 : vector<1x32xf32>
    %263 = arith.mulf %254, %261 : vector<1x32xf32>
    %264 = arith.addf %262, %263 : vector<1x32xf32>
    %265 = math.tanh %264 : vector<1x32xf32>
    %266 = arith.mulf %256, %265 : vector<1x32xf32>
    %267 = vector.extract_strided_slice %14 {offsets = [6, 0], sizes = [1, 128], strides = [1, 1]} : vector<8x128xf32> to vector<1x128xf32>
    %cst_61 = arith.constant dense<0.000000e+00> : vector<1x128xf32>
    %268 = tpu.matmul %245, %1, %cst_61 {dimension_numbers = #tpu.dot_dimension_numbers<[1], [0], [0], [1], [0, 0, 1, 1], [], []>} : vector<1x32xf32>, vector<32x128xf32>, vector<1x128xf32> -> vector<1x128xf32>
    %269 = arith.addf %267, %268 : vector<1x128xf32>
    %270 = arith.negf %269 : vector<1x128xf32>
    %271 = math.exp %270 : vector<1x128xf32>
    %cst_62 = arith.constant 1.000000e+00 : f32
    %272 = vector.broadcast %cst_62 : f32 to vector<1x128xf32>
    %273 = arith.addf %272, %271 : vector<1x128xf32>
    %274 = arith.divf %272, %273 : vector<1x128xf32>
    %275 = vector.extract_strided_slice %274 {offsets = [0, 0], sizes = [1, 32], strides = [1, 1]} : vector<1x128xf32> to vector<1x32xf32>
    %276 = vector.extract_strided_slice %274 {offsets = [0, 32], sizes = [1, 32], strides = [1, 1]} : vector<1x128xf32> to vector<1x32xf32>
    %277 = vector.extract_strided_slice %274 {offsets = [0, 96], sizes = [1, 32], strides = [1, 1]} : vector<1x128xf32> to vector<1x32xf32>
    %278 = vector.extract_strided_slice %274 {offsets = [0, 64], sizes = [1, 32], strides = [1, 1]} : vector<1x128xf32> to vector<1x32xf32>
    %cst_63 = arith.constant 2.000000e+00 : f32
    %279 = vector.broadcast %cst_63 : f32 to vector<1x32xf32>
    %280 = arith.mulf %279, %278 : vector<1x32xf32>
    %cst_64 = arith.constant 1.000000e+00 : f32
    %281 = vector.broadcast %cst_64 : f32 to vector<1x32xf32>
    %282 = arith.subf %280, %281 : vector<1x32xf32>
    %283 = arith.mulf %276, %243 : vector<1x32xf32>
    %284 = arith.mulf %275, %282 : vector<1x32xf32>
    %285 = arith.addf %283, %284 : vector<1x32xf32>
    %286 = math.tanh %285 : vector<1x32xf32>
    %287 = arith.mulf %277, %286 : vector<1x32xf32>
    %288 = tpu.concatenate %287, %266 in 1 : vector<1x32xf32>, vector<1x32xf32> -> vector<1x64xf32>
    %cst_65 = arith.constant dense<0.000000e+00> : vector<1x128xf32>
    %289 = tpu.matmul %288, %3, %cst_65 {dimension_numbers = #tpu.dot_dimension_numbers<[1], [0], [0], [1], [0, 0, 1, 1], [], []>} : vector<1x64xf32>, vector<64x128xf32>, vector<1x128xf32> -> vector<1x128xf32>
    %290 = arith.addf %289, %4 : vector<1x128xf32>
    %291 = arith.negf %290 : vector<1x128xf32>
    %292 = math.exp %291 : vector<1x128xf32>
    %cst_66 = arith.constant 1.000000e+00 : f32
    %293 = vector.broadcast %cst_66 : f32 to vector<1x128xf32>
    %294 = arith.addf %293, %292 : vector<1x128xf32>
    %295 = arith.divf %293, %294 : vector<1x128xf32>
    %296 = vector.extract_strided_slice %295 {offsets = [0, 0], sizes = [1, 32], strides = [1, 1]} : vector<1x128xf32> to vector<1x32xf32>
    %297 = vector.extract_strided_slice %295 {offsets = [0, 32], sizes = [1, 32], strides = [1, 1]} : vector<1x128xf32> to vector<1x32xf32>
    %298 = vector.extract_strided_slice %295 {offsets = [0, 96], sizes = [1, 32], strides = [1, 1]} : vector<1x128xf32> to vector<1x32xf32>
    %299 = vector.extract_strided_slice %295 {offsets = [0, 64], sizes = [1, 32], strides = [1, 1]} : vector<1x128xf32> to vector<1x32xf32>
    %cst_67 = arith.constant 2.000000e+00 : f32
    %300 = vector.broadcast %cst_67 : f32 to vector<1x32xf32>
    %301 = arith.mulf %300, %299 : vector<1x32xf32>
    %cst_68 = arith.constant 1.000000e+00 : f32
    %302 = vector.broadcast %cst_68 : f32 to vector<1x32xf32>
    %303 = arith.subf %301, %302 : vector<1x32xf32>
    %304 = arith.mulf %297, %264 : vector<1x32xf32>
    %305 = arith.mulf %296, %303 : vector<1x32xf32>
    %306 = arith.addf %304, %305 : vector<1x32xf32>
    %307 = math.tanh %306 : vector<1x32xf32>
    %308 = arith.mulf %298, %307 : vector<1x32xf32>
    %309 = vector.extract_strided_slice %14 {offsets = [7, 0], sizes = [1, 128], strides = [1, 1]} : vector<8x128xf32> to vector<1x128xf32>
    %cst_69 = arith.constant dense<0.000000e+00> : vector<1x128xf32>
    %310 = tpu.matmul %287, %1, %cst_69 {dimension_numbers = #tpu.dot_dimension_numbers<[1], [0], [0], [1], [0, 0, 1, 1], [], []>} : vector<1x32xf32>, vector<32x128xf32>, vector<1x128xf32> -> vector<1x128xf32>
    %311 = arith.addf %309, %310 : vector<1x128xf32>
    %312 = arith.negf %311 : vector<1x128xf32>
    %313 = math.exp %312 : vector<1x128xf32>
    %cst_70 = arith.constant 1.000000e+00 : f32
    %314 = vector.broadcast %cst_70 : f32 to vector<1x128xf32>
    %315 = arith.addf %314, %313 : vector<1x128xf32>
    %316 = arith.divf %314, %315 : vector<1x128xf32>
    %317 = vector.extract_strided_slice %316 {offsets = [0, 0], sizes = [1, 32], strides = [1, 1]} : vector<1x128xf32> to vector<1x32xf32>
    %318 = vector.extract_strided_slice %316 {offsets = [0, 32], sizes = [1, 32], strides = [1, 1]} : vector<1x128xf32> to vector<1x32xf32>
    %319 = vector.extract_strided_slice %316 {offsets = [0, 96], sizes = [1, 32], strides = [1, 1]} : vector<1x128xf32> to vector<1x32xf32>
    %320 = vector.extract_strided_slice %316 {offsets = [0, 64], sizes = [1, 32], strides = [1, 1]} : vector<1x128xf32> to vector<1x32xf32>
    %cst_71 = arith.constant 2.000000e+00 : f32
    %321 = vector.broadcast %cst_71 : f32 to vector<1x32xf32>
    %322 = arith.mulf %321, %320 : vector<1x32xf32>
    %cst_72 = arith.constant 1.000000e+00 : f32
    %323 = vector.broadcast %cst_72 : f32 to vector<1x32xf32>
    %324 = arith.subf %322, %323 : vector<1x32xf32>
    %325 = arith.mulf %318, %285 : vector<1x32xf32>
    %326 = arith.mulf %317, %324 : vector<1x32xf32>
    %327 = arith.addf %325, %326 : vector<1x32xf32>
    %328 = math.tanh %327 : vector<1x32xf32>
    %329 = arith.mulf %319, %328 : vector<1x32xf32>
    %330 = tpu.concatenate %329, %308 in 1 : vector<1x32xf32>, vector<1x32xf32> -> vector<1x64xf32>
    %cst_73 = arith.constant dense<0.000000e+00> : vector<1x128xf32>
    %331 = tpu.matmul %330, %3, %cst_73 {dimension_numbers = #tpu.dot_dimension_numbers<[1], [0], [0], [1], [0, 0, 1, 1], [], []>} : vector<1x64xf32>, vector<64x128xf32>, vector<1x128xf32> -> vector<1x128xf32>
    %332 = arith.addf %331, %4 : vector<1x128xf32>
    %333 = arith.negf %332 : vector<1x128xf32>
    %334 = math.exp %333 : vector<1x128xf32>
    %cst_74 = arith.constant 1.000000e+00 : f32
    %335 = vector.broadcast %cst_74 : f32 to vector<1x128xf32>
    %336 = arith.addf %335, %334 : vector<1x128xf32>
    %337 = arith.divf %335, %336 : vector<1x128xf32>
    %338 = vector.extract_strided_slice %337 {offsets = [0, 0], sizes = [1, 32], strides = [1, 1]} : vector<1x128xf32> to vector<1x32xf32>
    %339 = vector.extract_strided_slice %337 {offsets = [0, 32], sizes = [1, 32], strides = [1, 1]} : vector<1x128xf32> to vector<1x32xf32>
    %340 = vector.extract_strided_slice %337 {offsets = [0, 96], sizes = [1, 32], strides = [1, 1]} : vector<1x128xf32> to vector<1x32xf32>
    %341 = vector.extract_strided_slice %337 {offsets = [0, 64], sizes = [1, 32], strides = [1, 1]} : vector<1x128xf32> to vector<1x32xf32>
    %cst_75 = arith.constant 2.000000e+00 : f32
    %342 = vector.broadcast %cst_75 : f32 to vector<1x32xf32>
    %343 = arith.mulf %342, %341 : vector<1x32xf32>
    %cst_76 = arith.constant 1.000000e+00 : f32
    %344 = vector.broadcast %cst_76 : f32 to vector<1x32xf32>
    %345 = arith.subf %343, %344 : vector<1x32xf32>
    %346 = arith.mulf %339, %306 : vector<1x32xf32>
    %347 = arith.mulf %338, %345 : vector<1x32xf32>
    %348 = arith.addf %346, %347 : vector<1x32xf32>
    %349 = math.tanh %348 : vector<1x32xf32>
    %350 = arith.mulf %340, %349 : vector<1x32xf32>
    %cst_77 = arith.constant dense<0.000000e+00> : vector<1x128xf32>
    %351 = tpu.matmul %350, %5, %cst_77 {dimension_numbers = #tpu.dot_dimension_numbers<[1], [0], [0], [1], [0, 0, 1, 1], [], []>} : vector<1x32xf32>, vector<32x128xf32>, vector<1x128xf32> -> vector<1x128xf32>
    %352 = arith.addf %351, %6 : vector<1x128xf32>
    %c0_78 = arith.constant 0 : index
    %c0_79 = arith.constant 0 : index
    %353 = vector.load %arg2[%c0_78, %c0_79] : memref<1x128xf32, #tpu.memory_space<vmem>>, vector<1x128xf32>
    tpu.vector_store %arg2[%c0_78, %c0_79], %352 {strides = array<i32>} : memref<1x128xf32, #tpu.memory_space<vmem>>, vector<1x128xf32>,
    return
  }
}

</mosaic_0001>

<llo_original>
// kernel: squeeze.5
$region0: #{squeeze.5}
  %s0 = inlined_call_operand.vmem [shape: f32[24], index: 0, kind: input, shape index: {}]
  %s1 = inlined_call_operand.vmem [shape: f32[6,1,4], index: 1, kind: output, shape index: {}]
  $region1: #{squeeze.5} parent=0
    #allocation0 [shape = 'u8[4096]{0}', space=vmem, size = 0x1000, scoped, tag = 'scoped mem for input reshape']
    %s3 = sshllo.u32 0, 1
    %v4 = vld [vmem:[%s0] sm:%s3]
    %5 = vst [vmem:[#allocation0] sm:%s3] %v4
    %v6 = vld [vmem:[#allocation0] sm:$0x1]
    %vm7 = vcmask 31744
    %8 = vst.msk [vmem:[%s1] sm:$0x1] %vm7, %v6
    %v9 = vld [vmem:[#allocation0] sm:$0x1]
    %10 = vrot.lane.b32.xlu0 %v9, 124
    %v11 = vpop.permute.xlu0 %10
    %vm12 = vcmask 31744
    %s13 = scalar_lea.vmem %s1, 1
    %14 = vst.msk [vmem:[%s13] sm:$0x1] %vm12, %v11
    %v15 = vld [vmem:[#allocation0] sm:$0x1]
    %16 = vrot.lane.b32.xlu0 %v15, 120
    %v17 = vpop.permute.xlu0 %16
    %vm18 = vcmask 31744
    %s19 = scalar_lea.vmem %s1, 2
    %20 = vst.msk [vmem:[%s19] sm:$0x1] %vm18, %v17
    %v21 = vld [vmem:[#allocation0] sm:$0x1]
    %22 = vrot.lane.b32.xlu0 %v21, 116
    %v23 = vpop.permute.xlu0 %22
    %vm24 = vcmask 31744
    %s25 = scalar_lea.vmem %s1, 3
    %26 = vst.msk [vmem:[%s25] sm:$0x1] %vm24, %v23
    %v27 = vld [vmem:[#allocation0] sm:$0x1]
    %28 = vrot.lane.b32.xlu0 %v27, 112
    %v29 = vpop.permute.xlu0 %28
    %vm30 = vcmask 31744
    %s31 = scalar_lea.vmem %s1, 4
    %32 = vst.msk [vmem:[%s31] sm:$0x1] %vm30, %v29
    %v33 = vld [vmem:[#allocation0] sm:$0x1]
    %34 = vrot.lane.b32.xlu0 %v33, 108
    %v35 = vpop.permute.xlu0 %34
    %vm36 = vcmask 31744
    %s37 = scalar_lea.vmem %s1, 5
    %38 = vst.msk [vmem:[%s37] sm:$0x1] %vm36, %v35

// kernel: lstm_forward.1
$region0: #{lstm_forward.1}
  #allocation0 [shape = 'u32[]', space=smem, size = 0x4, offset = 0x4, fixed_abs, tag = 'smem constant byte address 0x4 - core index']
  #allocation1 [shape = 'u32[144,128]{1,0:T(1,128)}', space=vmem, size = 0x12000, scoped, tag = 'internal scratch']
  %s0 = inlined_call_operand.vmem [shape: f32[24,128], index: 0, kind: input, shape index: {}]
  %s1 = inlined_call_operand.hbm [shape: f32[264,128], index: 1, kind: input, shape index: {}]
  %s2 = inlined_call_operand.vmem [shape: f32[1,128], index: 2, kind: output, shape index: {}]
  %s3 = sld [smem:[#allocation0]]
  $region22: #{lstm_forward.1} parent=0
    _
  %s5 = ssub.s32 1, %s3
  %s6 = scalar_select 0, %s5, %s3
  $region1: #{lstm_forward.1} parent=0
    #allocation2 [shape = 'u8[135168]{0}', space=vmem, size = 0x21000, scoped, tag = 'input window, operand 1, single buffered']
    #allocation3 [shape = 's32[1]{0}', space=sflag, size = 0x4, scoped, tag = 'scoped memory for lstm_forward.1']
    %7 = vsyncpa [#allocation3], 0
    // Predicated region
    $region2: #{lstm_forward.1} parent=1 // pred_check
      _
    $region3: #{lstm_forward.1} parent=1 // pred_check_branch
      %9 = sbr.rel (0) target = $region5
    $region4: #{lstm_forward.1} parent=1 // pred_region
      _
    $region5: #{lstm_forward.1} parent=1 // pred_fallthru
      _
    // Predicated region
    $region6: #{lstm_forward.1} parent=1 // pred_check
      _
    $region7: #{lstm_forward.1} parent=1 // pred_check_branch
      %11 = sbr.rel (0) target = $region9
    $region8: #{lstm_forward.1} parent=1 // pred_region
      %s13 = ssub.s32 4224, 4224
      %14 = vsyncadd [#allocation3], %s13
      %s15 = sshll.u32 [#allocation2], 4
      %s16 = int_to_ptr.vmem [resolvable:$true] %s15
      %21 = dma.hbm_to_vmem [thread:$0]  %s1, 4224, %s16, [#allocation3], 128, 128, 8
    $region9: #{lstm_forward.1} parent=1 // pred_fallthru
      _
    // Predicated region
    $region10: #{lstm_forward.1} parent=1 // pred_check
      _
    $region11: #{lstm_forward.1} parent=1 // pred_check_branch
      %23 = sbr.rel (0) target = $region13
    $region12: #{lstm_forward.1} parent=1 // pred_region
      %24 = dma.done [#allocation3], 4224
    $region13: #{lstm_forward.1} parent=1 // pred_fallthru
      _
    %v25 = vld [vmem:[#allocation2] sm:$0xff]
    %v26 = vld [vmem:[#allocation2 + $0x8] sm:$0xff]
    %v27 = vld [vmem:[#allocation2 + $0x10] sm:$0xff]
    %v28 = vld [vmem:[#allocation2 + $0x18] sm:$0xff]
    %v29 = vld [vmem:[#allocation2 + $0x20] sm:$0xff]
    %v30 = vld [vmem:[#allocation2 + $0x28] sm:$0xff]
    %v31 = vld [vmem:[#allocation2 + $0x30] sm:$0xff]
    %v32 = vld [vmem:[#allocation2 + $0x38] sm:$0xff]
    %v33 = vld [vmem:[#allocation2 + $0x40] sm:$0xff]
    %v34 = vld [vmem:[#allocation2 + $0x48] sm:$0xff]
    %v35 = vld [vmem:[#allocation2 + $0x50] sm:$0xff]
    %v36 = vld [vmem:[#allocation2 + $0x58] sm:$0xff]
    %v37 = vld [vmem:[#allocation2 + $0x60] sm:$0xff]
    %v38 = vld [vmem:[#allocation2 + $0x68] sm:$0xff]
    %v39 = vld [vmem:[#allocation2 + $0x70] sm:$0xff]
    %v40 = vld [vmem:[#allocation2 + $0x78] sm:$0xff]
    %v41 = vld [vmem:[#allocation2 + $0x80] sm:$0xff]
    %v42 = vld [vmem:[#allocation2 + $0x88] sm:$0xff]
    %v43 = vld [vmem:[#allocation2 + $0x90] sm:$0xff]
    %v44 = vld [vmem:[#allocation2 + $0x98] sm:$0xff]
    %v45 = vld [vmem:[#allocation2 + $0xe0] sm:$0x1]
    %v46 = vld [vmem:[#allocation2 + $0xa0] sm:$0xff]
    %v47 = vld [vmem:[#allocation2 + $0xa8] sm:$0xff]
    %v48 = vld [vmem:[#allocation2 + $0xb0] sm:$0xff]
    %v49 = vld [vmem:[#allocation2 + $0xb8] sm:$0xff]
    %v50 = vld [vmem:[#allocation2 + $0xc0] sm:$0xff]
    %v51 = vld [vmem:[#allocation2 + $0xc8] sm:$0xff]
    %v52 = vld [vmem:[#allocation2 + $0xd0] sm:$0xff]
    %v53 = vld [vmem:[#allocation2 + $0xd8] sm:$0xff]
    %v54 = vld [vmem:[#allocation2 + $0xe1] sm:$0x1]
    %v55 = vld [vmem:[#allocation2 + $0xe8] sm:$0xff]
    %v56 = vld [vmem:[#allocation2 + $0xf0] sm:$0xff]
    %v57 = vld [vmem:[#allocation2 + $0xf8] sm:$0xff]
    %v58 = vld [vmem:[#allocation2 + $0x100] sm:$0xff]
    %v59 = vld [vmem:[#allocation2 + $0xe2] sm:$0x1]
    %v60 = vld [vmem:[%s0] sm:$0xff]
    %v61 = vld [vmem:[%s0 + $0x8] sm:$0x1]
    %v62 = vld [vmem:[%s0 + $0x9] sm:$0x1]
    %v63 = vld [vmem:[%s0 + $0x10] sm:$0x1]
    %v64 = vld [vmem:[%s0 + $0x11] sm:$0x1]
    %v65 = vlaneseq
    %v66 = vshrl.u32 %v65, 7
    %v67 = vsub.s32 0, %v66
    %v68 = vrot.slane %v45, %v67
    %69 = vmatprep.subr.mxu0 0.0
    %70 = vmatpush1.msra.mxu0 %v25
    %71 = vmatprep.subr.mxu0 0.0
    %72 = vmatpush1.msra.mxu0 %v26
    %73 = vmatprep.subr.mxu0 0.0
    %74 = vmatpush1.msra.mxu0 %v27
    %75 = vmatprep.subr.mxu0 0.0
    %76 = vmatpush1.msra.mxu0 %v28
    %77 = vmatprep.subr.mxu0 0.0
    %78 = vmatpush1.msra.mxu0 %v29
    %79 = vmatprep.subr.mxu0 0.0
    %80 = vmatpush1.msra.mxu0 %v30
    %81 = vmatprep.subr.mxu0 0.0
    %82 = vmatpush1.msra.mxu0 %v31
    %83 = vmatprep.subr.mxu0 0.0
    %84 = vmatpush1.msra.mxu0 %v32
    %85 = vmatprep.subr.mxu0 0.0
    %86 = vmatpush1.msra.mxu0 %v33
    %87 = vmatprep.subr.mxu0 0.0
    %88 = vmatpush1.msra.mxu0 %v34
    %89 = vmatprep.subr.mxu0 0.0
    %90 = vmatpush1.msra.mxu0 %v35
    %91 = vmatprep.subr.mxu0 0.0
    %92 = vmatpush1.msra.mxu0 %v36
    %93 = vmatprep.subr.mxu0 0.0
    %94 = vmatpush1.msra.mxu0 %v37
    %95 = vmatprep.subr.mxu0 0.0
    %96 = vmatpush1.msra.mxu0 %v38
    %97 = vmatprep.subr.mxu0 0.0
    %98 = vmatpush1.msra.mxu0 %v39
    %99 = vmatprep.subr.mxu0 0.0
    %100 = vmatpush1.msra.mxu0 %v40
    %101 = vmatprep.subr.mxu0 0.0
    %102 = vmatpush1.msra.mxu0 0.0
    %103 = vmatprep.subr.mxu0 0.0
    %104 = vmatpush1.msra.mxu0 0.0
    %105 = vmatprep.subr.mxu0 0.0
    %106 = vmatpush1.msra.mxu0 0.0
    %107 = vmatprep.subr.mxu0 0.0
    %108 = vmatpush1.msra.mxu0 0.0
    %109 = vmatprep.subr.mxu0 0.0
    %110 = vmatpush1.msra.mxu0 0.0
    %111 = vmatprep.subr.mxu0 0.0
    %112 = vmatpush1.msra.mxu0 0.0
    %113 = vmatprep.subr.mxu0 0.0
    %114 = vmatpush1.msra.mxu0 0.0
    %115 = vmatprep.subr.mxu0 0.0
    %116 = vmatpush1.msra.mxu0 0.0
    %117 = vmatprep.subr.mxu0 0.0
    %118 = vmatpush1.msra.mxu0 0.0
    %119 = vmatprep.subr.mxu0 0.0
    %120 = vmatpush1.msra.mxu0 0.0
    %121 = vmatprep.subr.mxu0 0.0
    %122 = vmatpush1.msra.mxu0 0.0
    %123 = vmatprep.subr.mxu0 0.0
    %124 = vmatpush1.msra.mxu0 0.0
    %125 = vmatprep.subr.mxu0 0.0
    %126 = vmatpush1.msra.mxu0 0.0
    %127 = vmatprep.subr.mxu0 0.0
    %128 = vmatpush1.msra.mxu0 0.0
    %129 = vmatprep.subr.mxu0 0.0
    %130 = vmatpush1.msra.mxu0 0.0
    %131 = vmatprep.subr.mxu0 0.0
    %132 = vmatpush1.msra.mxu0 0.0
    %133 = vmatprep.mubr.f32.mxu0 0.0
    %134 = vmatmul.mubr.f32.gmra.mrb[0].mxu0 %v60
    %v135 = vpop.f32.mrb[0].mxu0
    %v136 = vadd.f32 %v68, %v135
    %v137 = vpop.f32.mrb[0].mxu0
    %138 = vdwg.mxu0
    %vm139 = vcmask 261120
    %v141 = vsel %vm139, %v61, 0
    %143 = vmatprep.subr.mxu0 0.0
    %144 = vmatpush1.msra.mxu0 %v41
    %145 = vmatprep.subr.mxu0 0.0
    %146 = vmatpush1.msra.mxu0 %v42
    %147 = vmatprep.subr.mxu0 0.0
    %148 = vmatpush1.msra.mxu0 %v43
    %149 = vmatprep.subr.mxu0 0.0
    %150 = vmatpush1.msra.mxu0 %v44
    %151 = vmatprep.subr.mxu0 0.0
    %152 = vmatpush1.msra.mxu0 0.0
    %153 = vmatprep.subr.mxu0 0.0
    %154 = vmatpush1.msra.mxu0 0.0
    %155 = vmatprep.subr.mxu0 0.0
    %156 = vmatpush1.msra.mxu0 0.0
    %157 = vmatprep.subr.mxu0 0.0
    %158 = vmatpush1.msra.mxu0 0.0
    %159 = vmatprep.subr.mxu0 0.0
    %160 = vmatpush1.msra.mxu0 0.0
    %161 = vmatprep.subr.mxu0 0.0
    %162 = vmatpush1.msra.mxu0 0.0
    %163 = vmatprep.subr.mxu0 0.0
    %164 = vmatpush1.msra.mxu0 0.0
    %165 = vmatprep.subr.mxu0 0.0
    %166 = vmatpush1.msra.mxu0 0.0
    %167 = vmatprep.subr.mxu0 0.0
    %168 = vmatpush1.msra.mxu0 0.0
    %169 = vmatprep.subr.mxu0 0.0
    %170 = vmatpush1.msra.mxu0 0.0
    %171 = vmatprep.subr.mxu0 0.0
    %172 = vmatpush1.msra.mxu0 0.0
    %173 = vmatprep.subr.mxu0 0.0
    %174 = vmatpush1.msra.mxu0 0.0
    %175 = vmatprep.subr.mxu0 0.0
    %176 = vmatpush1.msra.mxu0 0.0
    %177 = vmatprep.subr.mxu0 0.0
    %178 = vmatpush1.msra.mxu0 0.0
    %179 = vmatprep.subr.mxu0 0.0
    %180 = vmatpush1.msra.mxu0 0.0
    %181 = vmatprep.subr.mxu0 0.0
    %182 = vmatpush1.msra.mxu0 0.0
    %183 = vmatprep.subr.mxu0 0.0
    %184 = vmatpush1.msra.mxu0 0.0
    %185 = vmatprep.subr.mxu0 0.0
    %186 = vmatpush1.msra.mxu0 0.0
    %187 = vmatprep.subr.mxu0 0.0
    %188 = vmatpush1.msra.mxu0 0.0
    %189 = vmatprep.subr.mxu0 0.0
    %190 = vmatpush1.msra.mxu0 0.0
    %191 = vmatprep.subr.mxu0 0.0
    %192 = vmatpush1.msra.mxu0 0.0
    %193 = vmatprep.subr.mxu0 0.0
    %194 = vmatpush1.msra.mxu0 0.0
    %195 = vmatprep.subr.mxu0 0.0
    %196 = vmatpush1.msra.mxu0 0.0
    %197 = vmatprep.subr.mxu0 0.0
    %198 = vmatpush1.msra.mxu0 0.0
    %199 = vmatprep.subr.mxu0 0.0
    %200 = vmatpush1.msra.mxu0 0.0
    %201 = vmatprep.subr.mxu0 0.0
    %202 = vmatpush1.msra.mxu0 0.0
    %203 = vmatprep.subr.mxu0 0.0
    %204 = vmatpush1.msra.mxu0 0.0
    %205 = vmatprep.subr.mxu0 0.0
    %206 = vmatpush1.msra.mxu0 0.0
    %207 = vmatprep.mubr.f32.mxu0 0.0
    %208 = vmatmul.mubr.f32.gmra.mrb[0].mxu0 %v141
    %v209 = vpop.f32.mrb[0].mxu0
    %v210 = vadd.f32 0.0, %v209
    %v211 = vpop.f32.mrb[0].mxu0
    %212 = vdwg.mxu0
    %v213 = vadd.f32 %v136, %v210
    %v214 = vxor.u32 %v213, 2147483648
    %v215 = vmul.f32 %v214, 1.442695
    %v216 = vpow.pop %v215
    %v217 = vadd.f32 %v216, 1.0
    %v218 = vrcp.pop %v217
    %v219 = vmul.f32 1.0, %v218
    %v220 = vmul.f32 %v219, 2.0
    %v221 = vsub.f32 %v220, 1.0
    %223 = vrot.lane.b32.xlu0 %v63, 32
    %v224 = vpop.permute.xlu0 %223
    %v226 = vmul.f32 %v219, %v224
    %228 = vrot.lane.b32.xlu0 %v221, 64
    %v229 = vpop.permute.xlu0 %228
    %v231 = vmul.f32 %v219, %v229
    %233 = vrot.lane.b32.xlu0 %v231, 32
    %v234 = vpop.permute.xlu0 %233
    %v236 = vadd.f32 %v226, %v234
    %v237 = vtanh.pop %v236
    %239 = vrot.lane.b32.xlu0 %v237, 64
    %v240 = vpop.permute.xlu0 %239
    %v242 = vmul.f32 %v219, %v240
    %244 = vrot.lane.b32.xlu0 %v242, 32
    %v245 = vpop.permute.xlu0 %244
    %248 = vrot.lane.b32.xlu0 %v62, 32
    %v249 = vpop.permute.xlu0 %248
    %v251 = vsel %vm139, %v245, %v249
    %vm252 = vcmask 523264
    %v254 = vsel %vm252, %v251, 0
    %256 = vmatprep.subr.mxu0 0.0
    %257 = vmatpush1.msra.mxu0 %v46
    %258 = vmatprep.subr.mxu0 0.0
    %259 = vmatpush1.msra.mxu0 %v47
    %260 = vmatprep.subr.mxu0 0.0
    %261 = vmatpush1.msra.mxu0 %v48
    %262 = vmatprep.subr.mxu0 0.0
    %263 = vmatpush1.msra.mxu0 %v49
    %264 = vmatprep.subr.mxu0 0.0
    %265 = vmatpush1.msra.mxu0 %v50
    %266 = vmatprep.subr.mxu0 0.0
    %267 = vmatpush1.msra.mxu0 %v51
    %268 = vmatprep.subr.mxu0 0.0
    %269 = vmatpush1.msra.mxu0 %v52
    %270 = vmatprep.subr.mxu0 0.0
    %271 = vmatpush1.msra.mxu0 %v53
    %272 = vmatprep.subr.mxu0 0.0
    %273 = vmatpush1.msra.mxu0 0.0
    %274 = vmatprep.subr.mxu0 0.0
    %275 = vmatpush1.msra.mxu0 0.0
    %276 = vmatprep.subr.mxu0 0.0
    %277 = vmatpush1.msra.mxu0 0.0
    %278 = vmatprep.subr.mxu0 0.0
    %279 = vmatpush1.msra.mxu0 0.0
    %280 = vmatprep.subr.mxu0 0.0
    %281 = vmatpush1.msra.mxu0 0.0
    %282 = vmatprep.subr.mxu0 0.0
    %283 = vmatpush1.msra.mxu0 0.0
    %284 = vmatprep.subr.mxu0 0.0
    %285 = vmatpush1.msra.mxu0 0.0
    %286 = vmatprep.subr.mxu0 0.0
    %287 = vmatpush1.msra.mxu0 0.0
    %288 = vmatprep.subr.mxu0 0.0
    %289 = vmatpush1.msra.mxu0 0.0
    %290 = vmatprep.subr.mxu0 0.0
    %291 = vmatpush1.msra.mxu0 0.0
    %292 = vmatprep.subr.mxu0 0.0
    %293 = vmatpush1.msra.mxu0 0.0
    %294 = vmatprep.subr.mxu0 0.0
    %295 = vmatpush1.msra.mxu0 0.0
    %296 = vmatprep.subr.mxu0 0.0
    %297 = vmatpush1.msra.mxu0 0.0
    %298 = vmatprep.subr.mxu0 0.0
    %299 = vmatpush1.msra.mxu0 0.0
    %300 = vmatprep.subr.mxu0 0.0
    %301 = vmatpush1.msra.mxu0 0.0
    %302 = vmatprep.subr.mxu0 0.0
    %303 = vmatpush1.msra.mxu0 0.0
    %304 = vmatprep.subr.mxu0 0.0
    %305 = vmatpush1.msra.mxu0 0.0
    %306 = vmatprep.subr.mxu0 0.0
    %307 = vmatpush1.msra.mxu0 0.0
    %308 = vmatprep.subr.mxu0 0.0
    %309 = vmatpush1.msra.mxu0 0.0
    %310 = vmatprep.subr.mxu0 0.0
    %311 = vmatpush1.msra.mxu0 0.0
    %312 = vmatprep.subr.mxu0 0.0
    %313 = vmatpush1.msra.mxu0 0.0
    %314 = vmatprep.subr.mxu0 0.0
    %315 = vmatpush1.msra.mxu0 0.0
    %316 = vmatprep.subr.mxu0 0.0
    %317 = vmatpush1.msra.mxu0 0.0
    %318 = vmatprep.subr.mxu0 0.0
    %319 = vmatpush1.msra.mxu0 0.0
    %320 = vmatprep.mubr.f32.mxu0 0.0
    %321 = vmatmul.mubr.f32.gmra.mrb[0].mxu0 %v254
    %v322 = vpop.f32.mrb[0].mxu0
    %v323 = vadd.f32 %v54, %v322
    %v324 = vpop.f32.mrb[0].mxu0
    %325 = vdwg.mxu0
    %v326 = vxor.u32 %v323, 2147483648
    %v327 = vmul.f32 %v326, 1.442695
    %v328 = vpow.pop %v327
    %v329 = vadd.f32 %v328, 1.0
    %v330 = vrcp.pop %v329
    %v331 = vmul.f32 1.0, %v330
    %v332 = vmul.f32 %v331, 2.0
    %v333 = vsub.f32 %v332, 1.0
    %335 = vrot.lane.b32.xlu0 %v64, 32
    %v336 = vpop.permute.xlu0 %335
    %v338 = vmul.f32 %v331, %v336
    %340 = vrot.lane.b32.xlu0 %v333, 64
    %v341 = vpop.permute.xlu0 %340
    %v343 = vmul.f32 %v331, %v341
    %345 = vrot.lane.b32.xlu0 %v343, 32
    %v346 = vpop.permute.xlu0 %345
    %v348 = vadd.f32 %v338, %v346
    %v349 = vtanh.pop %v348
    %351 = vrot.lane.b32.xlu0 %v349, 64
    %v352 = vpop.permute.xlu0 %351
    %v354 = vmul.f32 %v331, %v352
    %v355 = vsel %vm139, %v245, 0
    %357 = vmatprep.subr.mxu0 0.0
    %358 = vmatpush1.msra.mxu0 %v41
    %359 = vmatprep.subr.mxu0 0.0
    %360 = vmatpush1.msra.mxu0 %v42
    %361 = vmatprep.subr.mxu0 0.0
    %362 = vmatpush1.msra.mxu0 %v43
    %363 = vmatprep.subr.mxu0 0.0
    %364 = vmatpush1.msra.mxu0 %v44
    %365 = vmatprep.subr.mxu0 0.0
    %366 = vmatpush1.msra.mxu0 0.0
    %367 = vmatprep.subr.mxu0 0.0
    %368 = vmatpush1.msra.mxu0 0.0
    %369 = vmatprep.subr.mxu0 0.0
    %370 = vmatpush1.msra.mxu0 0.0
    %371 = vmatprep.subr.mxu0 0.0
    %372 = vmatpush1.msra.mxu0 0.0
    %373 = vmatprep.subr.mxu0 0.0
    %374 = vmatpush1.msra.mxu0 0.0
    %375 = vmatprep.subr.mxu0 0.0
    %376 = vmatpush1.msra.mxu0 0.0
    %377 = vmatprep.subr.mxu0 0.0
    %378 = vmatpush1.msra.mxu0 0.0
    %379 = vmatprep.subr.mxu0 0.0
    %380 = vmatpush1.msra.mxu0 0.0
    %381 = vmatprep.subr.mxu0 0.0
    %382 = vmatpush1.msra.mxu0 0.0
    %383 = vmatprep.subr.mxu0 0.0
    %384 = vmatpush1.msra.mxu0 0.0
    %385 = vmatprep.subr.mxu0 0.0
    %386 = vmatpush1.msra.mxu0 0.0
    %387 = vmatprep.subr.mxu0 0.0
    %388 = vmatpush1.msra.mxu0 0.0
    %389 = vmatprep.subr.mxu0 0.0
    %390 = vmatpush1.msra.mxu0 0.0
    %391 = vmatprep.subr.mxu0 0.0
    %392 = vmatpush1.msra.mxu0 0.0
    %393 = vmatprep.subr.mxu0 0.0
    %394 = vmatpush1.msra.mxu0 0.0
    %395 = vmatprep.subr.mxu0 0.0
    %396 = vmatpush1.msra.mxu0 0.0
    %397 = vmatprep.subr.mxu0 0.0
    %398 = vmatpush1.msra.mxu0 0.0
    %399 = vmatprep.subr.mxu0 0.0
    %400 = vmatpush1.msra.mxu0 0.0
    %401 = vmatprep.subr.mxu0 0.0
    %402 = vmatpush1.msra.mxu0 0.0
    %403 = vmatprep.subr.mxu0 0.0
    %404 = vmatpush1.msra.mxu0 0.0
    %405 = vmatprep.subr.mxu0 0.0
    %406 = vmatpush1.msra.mxu0 0.0
    %407 = vmatprep.subr.mxu0 0.0
    %408 = vmatpush1.msra.mxu0 0.0
    %409 = vmatprep.subr.mxu0 0.0
    %410 = vmatpush1.msra.mxu0 0.0
    %411 = vmatprep.subr.mxu0 0.0
    %412 = vmatpush1.msra.mxu0 0.0
    %413 = vmatprep.subr.mxu0 0.0
    %414 = vmatpush1.msra.mxu0 0.0
    %415 = vmatprep.subr.mxu0 0.0
    %416 = vmatpush1.msra.mxu0 0.0
    %417 = vmatprep.subr.mxu0 0.0
    %418 = vmatpush1.msra.mxu0 0.0
    %419 = vmatprep.subr.mxu0 0.0
    %420 = vmatpush1.msra.mxu0 0.0
    %421 = vmatprep.mubr.f32.mxu0 0.0
    %422 = vmatmul.mubr.f32.gmra.mrb[0].mxu0 %v355
    %v423 = vpop.f32.mrb[0].mxu0
    %v424 = vadd.f32 0.0, %v423
    %v425 = vpop.f32.mrb[0].mxu0
    %426 = vdwg.mxu0
    %v428 = vrot.slane %v424, 7
    %v430 = vadd.f32 %v136, %v428
    %v431 = vxor.u32 %v430, 2147483648
    %v432 = vmul.f32 %v431, 1.442695
    %v433 = vpow.pop %v432
    %v434 = vadd.f32 %v433, 1.0
    %v435 = vrcp.pop %v434
    %v436 = vmul.f32 1.0, %v435
    %v437 = vmul.f32 %v436, 2.0
    %v438 = vsub.f32 %v437, 1.0
    %v440 = vrot.slane %v236, 7
    %v442 = vmul.f32 %v436, %v440
    %444 = vrot.lane.b32.xlu0 %v438, 64
    %v445 = vpop.permute.xlu0 %444
    %v447 = vmul.f32 %v436, %v445
    %449 = vrot.lane.b32.xlu0 %v447, 32
    %v450 = vpop.permute.xlu0 %449
    %v452 = vadd.f32 %v442, %v450
    %v453 = vtanh.pop %v452
    %455 = vrot.lane.b32.xlu0 %v453, 64
    %v456 = vpop.permute.xlu0 %455
    %v458 = vmul.f32 %v436, %v456
    %460 = vrot.lane.b32.xlu0 %v458, 32
    %v461 = vpop.permute.xlu0 %460
    %v464 = vrot.slane %v354, 7
    %465 = vrot.lane.b32.xlu0 %v464, 64
    %v466 = vpop.permute.xlu0 %465
    %v468 = vsel %vm139, %v461, %v466
    %v470 = vrot.slane %v468, 1
    %v471 = vsel %vm252, %v470, 0
    %473 = vmatprep.subr.mxu0 0.0
    %474 = vmatpush1.msra.mxu0 %v46
    %475 = vmatprep.subr.mxu0 0.0
    %476 = vmatpush1.msra.mxu0 %v47
    %477 = vmatprep.subr.mxu0 0.0
    %478 = vmatpush1.msra.mxu0 %v48
    %479 = vmatprep.subr.mxu0 0.0
    %480 = vmatpush1.msra.mxu0 %v49
    %481 = vmatprep.subr.mxu0 0.0
    %482 = vmatpush1.msra.mxu0 %v50
    %483 = vmatprep.subr.mxu0 0.0
    %484 = vmatpush1.msra.mxu0 %v51
    %485 = vmatprep.subr.mxu0 0.0
    %486 = vmatpush1.msra.mxu0 %v52
    %487 = vmatprep.subr.mxu0 0.0
    %488 = vmatpush1.msra.mxu0 %v53
    %489 = vmatprep.subr.mxu0 0.0
    %490 = vmatpush1.msra.mxu0 0.0
    %491 = vmatprep.subr.mxu0 0.0
    %492 = vmatpush1.msra.mxu0 0.0
    %493 = vmatprep.subr.mxu0 0.0
    %494 = vmatpush1.msra.mxu0 0.0
    %495 = vmatprep.subr.mxu0 0.0
    %496 = vmatpush1.msra.mxu0 0.0
    %497 = vmatprep.subr.mxu0 0.0
    %498 = vmatpush1.msra.mxu0 0.0
    %499 = vmatprep.subr.mxu0 0.0
    %500 = vmatpush1.msra.mxu0 0.0
    %501 = vmatprep.subr.mxu0 0.0
    %502 = vmatpush1.msra.mxu0 0.0
    %503 = vmatprep.subr.mxu0 0.0
    %504 = vmatpush1.msra.mxu0 0.0
    %505 = vmatprep.subr.mxu0 0.0
    %506 = vmatpush1.msra.mxu0 0.0
    %507 = vmatprep.subr.mxu0 0.0
    %508 = vmatpush1.msra.mxu0 0.0
    %509 = vmatprep.subr.mxu0 0.0
    %510 = vmatpush1.msra.mxu0 0.0
    %511 = vmatprep.subr.mxu0 0.0
    %512 = vmatpush1.msra.mxu0 0.0
    %513 = vmatprep.subr.mxu0 0.0
    %514 = vmatpush1.msra.mxu0 0.0
    %515 = vmatprep.subr.mxu0 0.0
    %516 = vmatpush1.msra.mxu0 0.0
    %517 = vmatprep.subr.mxu0 0.0
    %518 = vmatpush1.msra.mxu0 0.0
    %519 = vmatprep.subr.mxu0 0.0
    %520 = vmatpush1.msra.mxu0 0.0
    %521 = vmatprep.subr.mxu0 0.0
    %522 = vmatpush1.msra.mxu0 0.0
    %523 = vmatprep.subr.mxu0 0.0
    %524 = vmatpush1.msra.mxu0 0.0
    %525 = vmatprep.subr.mxu0 0.0
    %526 = vmatpush1.msra.mxu0 0.0
    %527 = vmatprep.subr.mxu0 0.0
    %528 = vmatpush1.msra.mxu0 0.0
    %529 = vmatprep.subr.mxu0 0.0
    %530 = vmatpush1.msra.mxu0 0.0
    %531 = vmatprep.subr.mxu0 0.0
    %532 = vmatpush1.msra.mxu0 0.0
    %533 = vmatprep.subr.mxu0 0.0
    %534 = vmatpush1.msra.mxu0 0.0
    %535 = vmatprep.subr.mxu0 0.0
    %536 = vmatpush1.msra.mxu0 0.0
    %537 = vmatprep.mubr.f32.mxu0 0.0
    %538 = vmatmul.mubr.f32.gmra.mrb[0].mxu0 %v471
    %v539 = vpop.f32.mrb[0].mxu0
    %v540 = vadd.f32 %v54, %v539
    %v541 = vpop.f32.mrb[0].mxu0
    %542 = vdwg.mxu0
    %v543 = vxor.u32 %v540, 2147483648
    %v544 = vmul.f32 %v543, 1.442695
    %v545 = vpow.pop %v544
    %v546 = vadd.f32 %v545, 1.0
    %v547 = vrcp.pop %v546
    %v548 = vmul.f32 1.0, %v547
    %v549 = vmul.f32 %v548, 2.0
    %v550 = vsub.f32 %v549, 1.0
    %v551 = vmul.f32 %v548, %v348
    %553 = vrot.lane.b32.xlu0 %v550, 64
    %v554 = vpop.permute.xlu0 %553
    %v556 = vmul.f32 %v548, %v554
    %558 = vrot.lane.b32.xlu0 %v556, 32
    %v559 = vpop.permute.xlu0 %558
    %v561 = vadd.f32 %v551, %v559
    %v562 = vtanh.pop %v561
    %564 = vrot.lane.b32.xlu0 %v562, 64
    %v565 = vpop.permute.xlu0 %564
    %v567 = vmul.f32 %v548, %v565
    %v568 = vrot.slane %v458, 1
    %569 = vrot.lane.b32.xlu0 %v568, 32
    %v570 = vpop.permute.xlu0 %569
    %v571 = vsel %vm139, %v570, 0
    %573 = vmatprep.subr.mxu0 0.0
    %574 = vmatpush1.msra.mxu0 %v41
    %575 = vmatprep.subr.mxu0 0.0
    %576 = vmatpush1.msra.mxu0 %v42
    %577 = vmatprep.subr.mxu0 0.0
    %578 = vmatpush1.msra.mxu0 %v43
    %579 = vmatprep.subr.mxu0 0.0
    %580 = vmatpush1.msra.mxu0 %v44
    %581 = vmatprep.subr.mxu0 0.0
    %582 = vmatpush1.msra.mxu0 0.0
    %583 = vmatprep.subr.mxu0 0.0
    %584 = vmatpush1.msra.mxu0 0.0
    %585 = vmatprep.subr.mxu0 0.0
    %586 = vmatpush1.msra.mxu0 0.0
    %587 = vmatprep.subr.mxu0 0.0
    %588 = vmatpush1.msra.mxu0 0.0
    %589 = vmatprep.subr.mxu0 0.0
    %590 = vmatpush1.msra.mxu0 0.0
    %591 = vmatprep.subr.mxu0 0.0
    %592 = vmatpush1.msra.mxu0 0.0
    %593 = vmatprep.subr.mxu0 0.0
    %594 = vmatpush1.msra.mxu0 0.0
    %595 = vmatprep.subr.mxu0 0.0
    %596 = vmatpush1.msra.mxu0 0.0
    %597 = vmatprep.subr.mxu0 0.0
    %598 = vmatpush1.msra.mxu0 0.0
    %599 = vmatprep.subr.mxu0 0.0
    %600 = vmatpush1.msra.mxu0 0.0
    %601 = vmatprep.subr.mxu0 0.0
    %602 = vmatpush1.msra.mxu0 0.0
    %603 = vmatprep.subr.mxu0 0.0
    %604 = vmatpush1.msra.mxu0 0.0
    %605 = vmatprep.subr.mxu0 0.0
    %606 = vmatpush1.msra.mxu0 0.0
    %607 = vmatprep.subr.mxu0 0.0
    %608 = vmatpush1.msra.mxu0 0.0
    %609 = vmatprep.subr.mxu0 0.0
    %610 = vmatpush1.msra.mxu0 0.0
    %611 = vmatprep.subr.mxu0 0.0
    %612 = vmatpush1.msra.mxu0 0.0
    %613 = vmatprep.subr.mxu0 0.0
    %614 = vmatpush1.msra.mxu0 0.0
    %615 = vmatprep.subr.mxu0 0.0
    %616 = vmatpush1.msra.mxu0 0.0
    %617 = vmatprep.subr.mxu0 0.0
    %618 = vmatpush1.msra.mxu0 0.0
    %619 = vmatprep.subr.mxu0 0.0
    %620 = vmatpush1.msra.mxu0 0.0
    %621 = vmatprep.subr.mxu0 0.0
    %622 = vmatpush1.msra.mxu0 0.0
    %623 = vmatprep.subr.mxu0 0.0
    %624 = vmatpush1.msra.mxu0 0.0
    %625 = vmatprep.subr.mxu0 0.0
    %626 = vmatpush1.msra.mxu0 0.0
    %627 = vmatprep.subr.mxu0 0.0
    %628 = vmatpush1.msra.mxu0 0.0
    %629 = vmatprep.subr.mxu0 0.0
    %630 = vmatpush1.msra.mxu0 0.0
    %631 = vmatprep.subr.mxu0 0.0
    %632 = vmatpush1.msra.mxu0 0.0
    %633 = vmatprep.subr.mxu0 0.0
    %634 = vmatpush1.msra.mxu0 0.0
    %635 = vmatprep.subr.mxu0 0.0
    %636 = vmatpush1.msra.mxu0 0.0
    %637 = vmatprep.mubr.f32.mxu0 0.0
    %638 = vmatmul.mubr.f32.gmra.mrb[0].mxu0 %v571
    %v639 = vpop.f32.mrb[0].mxu0
    %v640 = vadd.f32 0.0, %v639
    %v641 = vpop.f32.mrb[0].mxu0
    %642 = vdwg.mxu0
    %v644 = vrot.slane %v640, 6
    %v646 = vadd.f32 %v136, %v644
    %v647 = vxor.u32 %v646, 2147483648
    %v648 = vmul.f32 %v647, 1.442695
    %v649 = vpow.pop %v648
    %v650 = vadd.f32 %v649, 1.0
    %v651 = vrcp.pop %v650
    %v652 = vmul.f32 1.0, %v651
    %v653 = vmul.f32 %v652, 2.0
    %v654 = vsub.f32 %v653, 1.0
    %v656 = vrot.slane %v452, 7
    %v658 = vmul.f32 %v652, %v656
    %660 = vrot.lane.b32.xlu0 %v654, 64
    %v661 = vpop.permute.xlu0 %660
    %v663 = vmul.f32 %v652, %v661
    %665 = vrot.lane.b32.xlu0 %v663, 32
    %v666 = vpop.permute.xlu0 %665
    %v668 = vadd.f32 %v658, %v666
    %v669 = vtanh.pop %v668
    %671 = vrot.lane.b32.xlu0 %v669, 64
    %v672 = vpop.permute.xlu0 %671
    %v674 = vmul.f32 %v652, %v672
    %676 = vrot.lane.b32.xlu0 %v674, 32
    %v677 = vpop.permute.xlu0 %676
    %v680 = vrot.slane %v567, 6
    %681 = vrot.lane.b32.xlu0 %v680, 64
    %v682 = vpop.permute.xlu0 %681
    %v684 = vsel %vm139, %v677, %v682
    %v686 = vrot.slane %v684, 2
    %v687 = vsel %vm252, %v686, 0
    %689 = vmatprep.subr.mxu0 0.0
    %690 = vmatpush1.msra.mxu0 %v46
    %691 = vmatprep.subr.mxu0 0.0
    %692 = vmatpush1.msra.mxu0 %v47
    %693 = vmatprep.subr.mxu0 0.0
    %694 = vmatpush1.msra.mxu0 %v48
    %695 = vmatprep.subr.mxu0 0.0
    %696 = vmatpush1.msra.mxu0 %v49
    %697 = vmatprep.subr.mxu0 0.0
    %698 = vmatpush1.msra.mxu0 %v50
    %699 = vmatprep.subr.mxu0 0.0
    %700 = vmatpush1.msra.mxu0 %v51
    %701 = vmatprep.subr.mxu0 0.0
    %702 = vmatpush1.msra.mxu0 %v52
    %703 = vmatprep.subr.mxu0 0.0
    %704 = vmatpush1.msra.mxu0 %v53
    %705 = vmatprep.subr.mxu0 0.0
    %706 = vmatpush1.msra.mxu0 0.0
    %707 = vmatprep.subr.mxu0 0.0
    %708 = vmatpush1.msra.mxu0 0.0
    %709 = vmatprep.subr.mxu0 0.0
    %710 = vmatpush1.msra.mxu0 0.0
    %711 = vmatprep.subr.mxu0 0.0
    %712 = vmatpush1.msra.mxu0 0.0
    %713 = vmatprep.subr.mxu0 0.0
    %714 = vmatpush1.msra.mxu0 0.0
    %715 = vmatprep.subr.mxu0 0.0
    %716 = vmatpush1.msra.mxu0 0.0
    %717 = vmatprep.subr.mxu0 0.0
    %718 = vmatpush1.msra.mxu0 0.0
    %719 = vmatprep.subr.mxu0 0.0
    %720 = vmatpush1.msra.mxu0 0.0
    %721 = vmatprep.subr.mxu0 0.0
    %722 = vmatpush1.msra.mxu0 0.0
    %723 = vmatprep.subr.mxu0 0.0
    %724 = vmatpush1.msra.mxu0 0.0
    %725 = vmatprep.subr.mxu0 0.0
    %726 = vmatpush1.msra.mxu0 0.0
    %727 = vmatprep.subr.mxu0 0.0
    %728 = vmatpush1.msra.mxu0 0.0
    %729 = vmatprep.subr.mxu0 0.0
    %730 = vmatpush1.msra.mxu0 0.0
    %731 = vmatprep.subr.mxu0 0.0
    %732 = vmatpush1.msra.mxu0 0.0
    %733 = vmatprep.subr.mxu0 0.0
    %734 = vmatpush1.msra.mxu0 0.0
    %735 = vmatprep.subr.mxu0 0.0
    %736 = vmatpush1.msra.mxu0 0.0
    %737 = vmatprep.subr.mxu0 0.0
    %738 = vmatpush1.msra.mxu0 0.0
    %739 = vmatprep.subr.mxu0 0.0
    %740 = vmatpush1.msra.mxu0 0.0
    %741 = vmatprep.subr.mxu0 0.0
    %742 = vmatpush1.msra.mxu0 0.0
    %743 = vmatprep.subr.mxu0 0.0
    %744 = vmatpush1.msra.mxu0 0.0
    %745 = vmatprep.subr.mxu0 0.0
    %746 = vmatpush1.msra.mxu0 0.0
    %747 = vmatprep.subr.mxu0 0.0
    %748 = vmatpush1.msra.mxu0 0.0
    %749 = vmatprep.subr.mxu0 0.0
    %750 = vmatpush1.msra.mxu0 0.0
    %751 = vmatprep.subr.mxu0 0.0
    %752 = vmatpush1.msra.mxu0 0.0
    %753 = vmatprep.mubr.f32.mxu0 0.0
    %754 = vmatmul.mubr.f32.gmra.mrb[0].mxu0 %v687
    %v755 = vpop.f32.mrb[0].mxu0
    %v756 = vadd.f32 %v54, %v755
    %v757 = vpop.f32.mrb[0].mxu0
    %758 = vdwg.mxu0
    %v759 = vxor.u32 %v756, 2147483648
    %v760 = vmul.f32 %v759, 1.442695
    %v761 = vpow.pop %v760
    %v762 = vadd.f32 %v761, 1.0
    %v763 = vrcp.pop %v762
    %v764 = vmul.f32 1.0, %v763
    %v765 = vmul.f32 %v764, 2.0
    %v766 = vsub.f32 %v765, 1.0
    %v767 = vmul.f32 %v764, %v561
    %769 = vrot.lane.b32.xlu0 %v766, 64
    %v770 = vpop.permute.xlu0 %769
    %v772 = vmul.f32 %v764, %v770
    %774 = vrot.lane.b32.xlu0 %v772, 32
    %v775 = vpop.permute.xlu0 %774
    %v777 = vadd.f32 %v767, %v775
    %v778 = vtanh.pop %v777
    %780 = vrot.lane.b32.xlu0 %v778, 64
    %v781 = vpop.permute.xlu0 %780
    %v783 = vmul.f32 %v764, %v781
    %v784 = vrot.slane %v674, 2
    %785 = vrot.lane.b32.xlu0 %v784, 32
    %v786 = vpop.permute.xlu0 %785
    %v787 = vsel %vm139, %v786, 0
    %789 = vmatprep.subr.mxu0 0.0
    %790 = vmatpush1.msra.mxu0 %v41
    %791 = vmatprep.subr.mxu0 0.0
    %792 = vmatpush1.msra.mxu0 %v42
    %793 = vmatprep.subr.mxu0 0.0
    %794 = vmatpush1.msra.mxu0 %v43
    %795 = vmatprep.subr.mxu0 0.0
    %796 = vmatpush1.msra.mxu0 %v44
    %797 = vmatprep.subr.mxu0 0.0
    %798 = vmatpush1.msra.mxu0 0.0
    %799 = vmatprep.subr.mxu0 0.0
    %800 = vmatpush1.msra.mxu0 0.0
    %801 = vmatprep.subr.mxu0 0.0
    %802 = vmatpush1.msra.mxu0 0.0
    %803 = vmatprep.subr.mxu0 0.0
    %804 = vmatpush1.msra.mxu0 0.0
    %805 = vmatprep.subr.mxu0 0.0
    %806 = vmatpush1.msra.mxu0 0.0
    %807 = vmatprep.subr.mxu0 0.0
    %808 = vmatpush1.msra.mxu0 0.0
    %809 = vmatprep.subr.mxu0 0.0
    %810 = vmatpush1.msra.mxu0 0.0
    %811 = vmatprep.subr.mxu0 0.0
    %812 = vmatpush1.msra.mxu0 0.0
    %813 = vmatprep.subr.mxu0 0.0
    %814 = vmatpush1.msra.mxu0 0.0
    %815 = vmatprep.subr.mxu0 0.0
    %816 = vmatpush1.msra.mxu0 0.0
    %817 = vmatprep.subr.mxu0 0.0
    %818 = vmatpush1.msra.mxu0 0.0
    %819 = vmatprep.subr.mxu0 0.0
    %820 = vmatpush1.msra.mxu0 0.0
    %821 = vmatprep.subr.mxu0 0.0
    %822 = vmatpush1.msra.mxu0 0.0
    %823 = vmatprep.subr.mxu0 0.0
    %824 = vmatpush1.msra.mxu0 0.0
    %825 = vmatprep.subr.mxu0 0.0
    %826 = vmatpush1.msra.mxu0 0.0
    %827 = vmatprep.subr.mxu0 0.0
    %828 = vmatpush1.msra.mxu0 0.0
    %829 = vmatprep.subr.mxu0 0.0
    %830 = vmatpush1.msra.mxu0 0.0
    %831 = vmatprep.subr.mxu0 0.0
    %832 = vmatpush1.msra.mxu0 0.0
    %833 = vmatprep.subr.mxu0 0.0
    %834 = vmatpush1.msra.mxu0 0.0
    %835 = vmatprep.subr.mxu0 0.0
    %836 = vmatpush1.msra.mxu0 0.0
    %837 = vmatprep.subr.mxu0 0.0
    %838 = vmatpush1.msra.mxu0 0.0
    %839 = vmatprep.subr.mxu0 0.0
    %840 = vmatpush1.msra.mxu0 0.0
    %841 = vmatprep.subr.mxu0 0.0
    %842 = vmatpush1.msra.mxu0 0.0
    %843 = vmatprep.subr.mxu0 0.0
    %844 = vmatpush1.msra.mxu0 0.0
    %845 = vmatprep.subr.mxu0 0.0
    %846 = vmatpush1.msra.mxu0 0.0
    %847 = vmatprep.subr.mxu0 0.0
    %848 = vmatpush1.msra.mxu0 0.0
    %849 = vmatprep.subr.mxu0 0.0
    %850 = vmatpush1.msra.mxu0 0.0
    %851 = vmatprep.subr.mxu0 0.0
    %852 = vmatpush1.msra.mxu0 0.0
    %853 = vmatprep.mubr.f32.mxu0 0.0
    %854 = vmatmul.mubr.f32.gmra.mrb[0].mxu0 %v787
    %v855 = vpop.f32.mrb[0].mxu0
    %v856 = vadd.f32 0.0, %v855
    %v857 = vpop.f32.mrb[0].mxu0
    %858 = vdwg.mxu0
    %v860 = vrot.slane %v856, 5
    %v862 = vadd.f32 %v136, %v860
    %v863 = vxor.u32 %v862, 2147483648
    %v864 = vmul.f32 %v863, 1.442695
    %v865 = vpow.pop %v864
    %v866 = vadd.f32 %v865, 1.0
    %v867 = vrcp.pop %v866
    %v868 = vmul.f32 1.0, %v867
    %v869 = vmul.f32 %v868, 2.0
    %v870 = vsub.f32 %v869, 1.0
    %v872 = vrot.slane %v668, 7
    %v874 = vmul.f32 %v868, %v872
    %876 = vrot.lane.b32.xlu0 %v870, 64
    %v877 = vpop.permute.xlu0 %876
    %v879 = vmul.f32 %v868, %v877
    %881 = vrot.lane.b32.xlu0 %v879, 32
    %v882 = vpop.permute.xlu0 %881
    %v884 = vadd.f32 %v874, %v882
    %v885 = vtanh.pop %v884
    %887 = vrot.lane.b32.xlu0 %v885, 64
    %v888 = vpop.permute.xlu0 %887
    %v890 = vmul.f32 %v868, %v888
    %892 = vrot.lane.b32.xlu0 %v890, 32
    %v893 = vpop.permute.xlu0 %892
    %v896 = vrot.slane %v783, 5
    %897 = vrot.lane.b32.xlu0 %v896, 64
    %v898 = vpop.permute.xlu0 %897
    %v900 = vsel %vm139, %v893, %v898
    %v902 = vrot.slane %v900, 3
    %v903 = vsel %vm252, %v902, 0
    %905 = vmatprep.subr.mxu0 0.0
    %906 = vmatpush1.msra.mxu0 %v46
    %907 = vmatprep.subr.mxu0 0.0
    %908 = vmatpush1.msra.mxu0 %v47
    %909 = vmatprep.subr.mxu0 0.0
    %910 = vmatpush1.msra.mxu0 %v48
    %911 = vmatprep.subr.mxu0 0.0
    %912 = vmatpush1.msra.mxu0 %v49
    %913 = vmatprep.subr.mxu0 0.0
    %914 = vmatpush1.msra.mxu0 %v50
    %915 = vmatprep.subr.mxu0 0.0
    %916 = vmatpush1.msra.mxu0 %v51
    %917 = vmatprep.subr.mxu0 0.0
    %918 = vmatpush1.msra.mxu0 %v52
    %919 = vmatprep.subr.mxu0 0.0
    %920 = vmatpush1.msra.mxu0 %v53
    %921 = vmatprep.subr.mxu0 0.0
    %922 = vmatpush1.msra.mxu0 0.0
    %923 = vmatprep.subr.mxu0 0.0
    %924 = vmatpush1.msra.mxu0 0.0
    %925 = vmatprep.subr.mxu0 0.0
    %926 = vmatpush1.msra.mxu0 0.0
    %927 = vmatprep.subr.mxu0 0.0
    %928 = vmatpush1.msra.mxu0 0.0
    %929 = vmatprep.subr.mxu0 0.0
    %930 = vmatpush1.msra.mxu0 0.0
    %931 = vmatprep.subr.mxu0 0.0
    %932 = vmatpush1.msra.mxu0 0.0
    %933 = vmatprep.subr.mxu0 0.0
    %934 = vmatpush1.msra.mxu0 0.0
    %935 = vmatprep.subr.mxu0 0.0
    %936 = vmatpush1.msra.mxu0 0.0
    %937 = vmatprep.subr.mxu0 0.0
    %938 = vmatpush1.msra.mxu0 0.0
    %939 = vmatprep.subr.mxu0 0.0
    %940 = vmatpush1.msra.mxu0 0.0
    %941 = vmatprep.subr.mxu0 0.0
    %942 = vmatpush1.msra.mxu0 0.0
    %943 = vmatprep.subr.mxu0 0.0
    %944 = vmatpush1.msra.mxu0 0.0
    %945 = vmatprep.subr.mxu0 0.0
    %946 = vmatpush1.msra.mxu0 0.0
    %947 = vmatprep.subr.mxu0 0.0
    %948 = vmatpush1.msra.mxu0 0.0
    %949 = vmatprep.subr.mxu0 0.0
    %950 = vmatpush1.msra.mxu0 0.0
    %951 = vmatprep.subr.mxu0 0.0
    %952 = vmatpush1.msra.mxu0 0.0
    %953 = vmatprep.subr.mxu0 0.0
    %954 = vmatpush1.msra.mxu0 0.0
    %955 = vmatprep.subr.mxu0 0.0
    %956 = vmatpush1.msra.mxu0 0.0
    %957 = vmatprep.subr.mxu0 0.0
    %958 = vmatpush1.msra.mxu0 0.0
    %959 = vmatprep.subr.mxu0 0.0
    %960 = vmatpush1.msra.mxu0 0.0
    %961 = vmatprep.subr.mxu0 0.0
    %962 = vmatpush1.msra.mxu0 0.0
    %963 = vmatprep.subr.mxu0 0.0
    %964 = vmatpush1.msra.mxu0 0.0
    %965 = vmatprep.subr.mxu0 0.0
    %966 = vmatpush1.msra.mxu0 0.0
    %967 = vmatprep.subr.mxu0 0.0
    %968 = vmatpush1.msra.mxu0 0.0
    %969 = vmatprep.mubr.f32.mxu0 0.0
    %970 = vmatmul.mubr.f32.gmra.mrb[0].mxu0 %v903
    %v971 = vpop.f32.mrb[0].mxu0
    %v972 = vadd.f32 %v54, %v971
    %v973 = vpop.f32.mrb[0].mxu0
    %974 = vdwg.mxu0
    %v975 = vxor.u32 %v972, 2147483648
    %v976 = vmul.f32 %v975, 1.442695
    %v977 = vpow.pop %v976
    %v978 = vadd.f32 %v977, 1.0
    %v979 = vrcp.pop %v978
    %v980 = vmul.f32 1.0, %v979
    %v981 = vmul.f32 %v980, 2.0
    %v982 = vsub.f32 %v981, 1.0
    %v983 = vmul.f32 %v980, %v777
    %985 = vrot.lane.b32.xlu0 %v982, 64
    %v986 = vpop.permute.xlu0 %985
    %v988 = vmul.f32 %v980, %v986
    %990 = vrot.lane.b32.xlu0 %v988, 32
    %v991 = vpop.permute.xlu0 %990
    %v993 = vadd.f32 %v983, %v991
    %v994 = vtanh.pop %v993
    %996 = vrot.lane.b32.xlu0 %v994, 64
    %v997 = vpop.permute.xlu0 %996
    %v999 = vmul.f32 %v980, %v997
    %v1000 = vrot.slane %v890, 3
    %1001 = vrot.lane.b32.xlu0 %v1000, 32
    %v1002 = vpop.permute.xlu0 %1001
    %v1003 = vsel %vm139, %v1002, 0
    %1005 = vmatprep.subr.mxu0 0.0
    %1006 = vmatpush1.msra.mxu0 %v41
    %1007 = vmatprep.subr.mxu0 0.0
    %1008 = vmatpush1.msra.mxu0 %v42
    %1009 = vmatprep.subr.mxu0 0.0
    %1010 = vmatpush1.msra.mxu0 %v43
    %1011 = vmatprep.subr.mxu0 0.0
    %1012 = vmatpush1.msra.mxu0 %v44
    %1013 = vmatprep.subr.mxu0 0.0
    %1014 = vmatpush1.msra.mxu0 0.0
    %1015 = vmatprep.subr.mxu0 0.0
    %1016 = vmatpush1.msra.mxu0 0.0
    %1017 = vmatprep.subr.mxu0 0.0
    %1018 = vmatpush1.msra.mxu0 0.0
    %1019 = vmatprep.subr.mxu0 0.0
    %1020 = vmatpush1.msra.mxu0 0.0
    %1021 = vmatprep.subr.mxu0 0.0
    %1022 = vmatpush1.msra.mxu0 0.0
    %1023 = vmatprep.subr.mxu0 0.0
    %1024 = vmatpush1.msra.mxu0 0.0
    %1025 = vmatprep.subr.mxu0 0.0
    %1026 = vmatpush1.msra.mxu0 0.0
    %1027 = vmatprep.subr.mxu0 0.0
    %1028 = vmatpush1.msra.mxu0 0.0
    %1029 = vmatprep.subr.mxu0 0.0
    %1030 = vmatpush1.msra.mxu0 0.0
    %1031 = vmatprep.subr.mxu0 0.0
    %1032 = vmatpush1.msra.mxu0 0.0
    %1033 = vmatprep.subr.mxu0 0.0
    %1034 = vmatpush1.msra.mxu0 0.0
    %1035 = vmatprep.subr.mxu0 0.0
    %1036 = vmatpush1.msra.mxu0 0.0
    %1037 = vmatprep.subr.mxu0 0.0
    %1038 = vmatpush1.msra.mxu0 0.0
    %1039 = vmatprep.subr.mxu0 0.0
    %1040 = vmatpush1.msra.mxu0 0.0
    %1041 = vmatprep.subr.mxu0 0.0
    %1042 = vmatpush1.msra.mxu0 0.0
    %1043 = vmatprep.subr.mxu0 0.0
    %1044 = vmatpush1.msra.mxu0 0.0
    %1045 = vmatprep.subr.mxu0 0.0
    %1046 = vmatpush1.msra.mxu0 0.0
    %1047 = vmatprep.subr.mxu0 0.0
    %1048 = vmatpush1.msra.mxu0 0.0
    %1049 = vmatprep.subr.mxu0 0.0
    %1050 = vmatpush1.msra.mxu0 0.0
    %1051 = vmatprep.subr.mxu0 0.0
    %1052 = vmatpush1.msra.mxu0 0.0
    %1053 = vmatprep.subr.mxu0 0.0
    %1054 = vmatpush1.msra.mxu0 0.0
    %1055 = vmatprep.subr.mxu0 0.0
    %1056 = vmatpush1.msra.mxu0 0.0
    %1057 = vmatprep.subr.mxu0 0.0
    %1058 = vmatpush1.msra.mxu0 0.0
    %1059 = vmatprep.subr.mxu0 0.0
    %1060 = vmatpush1.msra.mxu0 0.0
    %1061 = vmatprep.subr.mxu0 0.0
    %1062 = vmatpush1.msra.mxu0 0.0
    %1063 = vmatprep.subr.mxu0 0.0
    %1064 = vmatpush1.msra.mxu0 0.0
    %1065 = vmatprep.subr.mxu0 0.0
    %1066 = vmatpush1.msra.mxu0 0.0
    %1067 = vmatprep.subr.mxu0 0.0
    %1068 = vmatpush1.msra.mxu0 0.0
    %1069 = vmatprep.mubr.f32.mxu0 0.0
    %1070 = vmatmul.mubr.f32.gmra.mrb[0].mxu0 %v1003
    %v1071 = vpop.f32.mrb[0].mxu0
    %v1072 = vadd.f32 0.0, %v1071
    %v1073 = vpop.f32.mrb[0].mxu0
    %1074 = vdwg.mxu0
    %v1076 = vrot.slane %v1072, 4
    %v1078 = vadd.f32 %v136, %v1076
    %v1079 = vxor.u32 %v1078, 2147483648
    %v1080 = vmul.f32 %v1079, 1.442695
    %v1081 = vpow.pop %v1080
    %v1082 = vadd.f32 %v1081, 1.0
    %v1083 = vrcp.pop %v1082
    %v1084 = vmul.f32 1.0, %v1083
    %v1085 = vmul.f32 %v1084, 2.0
    %v1086 = vsub.f32 %v1085, 1.0
    %v1088 = vrot.slane %v884, 7
    %v1090 = vmul.f32 %v1084, %v1088
    %1092 = vrot.lane.b32.xlu0 %v1086, 64
    %v1093 = vpop.permute.xlu0 %1092
    %v1095 = vmul.f32 %v1084, %v1093
    %1097 = vrot.lane.b32.xlu0 %v1095, 32
    %v1098 = vpop.permute.xlu0 %1097
    %v1100 = vadd.f32 %v1090, %v1098
    %v1101 = vtanh.pop %v1100
    %1103 = vrot.lane.b32.xlu0 %v1101, 64
    %v1104 = vpop.permute.xlu0 %1103
    %v1106 = vmul.f32 %v1084, %v1104
    %1108 = vrot.lane.b32.xlu0 %v1106, 32
    %v1109 = vpop.permute.xlu0 %1108
    %v1112 = vrot.slane %v999, 4
    %1113 = vrot.lane.b32.xlu0 %v1112, 64
    %v1114 = vpop.permute.xlu0 %1113
    %v1116 = vsel %vm139, %v1109, %v1114
    %v1118 = vrot.slane %v1116, 4
    %v1119 = vsel %vm252, %v1118, 0
    %1121 = vmatprep.subr.mxu0 0.0
    %1122 = vmatpush1.msra.mxu0 %v46
    %1123 = vmatprep.subr.mxu0 0.0
    %1124 = vmatpush1.msra.mxu0 %v47
    %1125 = vmatprep.subr.mxu0 0.0
    %1126 = vmatpush1.msra.mxu0 %v48
    %1127 = vmatprep.subr.mxu0 0.0
    %1128 = vmatpush1.msra.mxu0 %v49
    %1129 = vmatprep.subr.mxu0 0.0
    %1130 = vmatpush1.msra.mxu0 %v50
    %1131 = vmatprep.subr.mxu0 0.0
    %1132 = vmatpush1.msra.mxu0 %v51
    %1133 = vmatprep.subr.mxu0 0.0
    %1134 = vmatpush1.msra.mxu0 %v52
    %1135 = vmatprep.subr.mxu0 0.0
    %1136 = vmatpush1.msra.mxu0 %v53
    %1137 = vmatprep.subr.mxu0 0.0
    %1138 = vmatpush1.msra.mxu0 0.0
    %1139 = vmatprep.subr.mxu0 0.0
    %1140 = vmatpush1.msra.mxu0 0.0
    %1141 = vmatprep.subr.mxu0 0.0
    %1142 = vmatpush1.msra.mxu0 0.0
    %1143 = vmatprep.subr.mxu0 0.0
    %1144 = vmatpush1.msra.mxu0 0.0
    %1145 = vmatprep.subr.mxu0 0.0
    %1146 = vmatpush1.msra.mxu0 0.0
    %1147 = vmatprep.subr.mxu0 0.0
    %1148 = vmatpush1.msra.mxu0 0.0
    %1149 = vmatprep.subr.mxu0 0.0
    %1150 = vmatpush1.msra.mxu0 0.0
    %1151 = vmatprep.subr.mxu0 0.0
    %1152 = vmatpush1.msra.mxu0 0.0
    %1153 = vmatprep.subr.mxu0 0.0
    %1154 = vmatpush1.msra.mxu0 0.0
    %1155 = vmatprep.subr.mxu0 0.0
    %1156 = vmatpush1.msra.mxu0 0.0
    %1157 = vmatprep.subr.mxu0 0.0
    %1158 = vmatpush1.msra.mxu0 0.0
    %1159 = vmatprep.subr.mxu0 0.0
    %1160 = vmatpush1.msra.mxu0 0.0
    %1161 = vmatprep.subr.mxu0 0.0
    %1162 = vmatpush1.msra.mxu0 0.0
    %1163 = vmatprep.subr.mxu0 0.0
    %1164 = vmatpush1.msra.mxu0 0.0
    %1165 = vmatprep.subr.mxu0 0.0
    %1166 = vmatpush1.msra.mxu0 0.0
    %1167 = vmatprep.subr.mxu0 0.0
    %1168 = vmatpush1.msra.mxu0 0.0
    %1169 = vmatprep.subr.mxu0 0.0
    %1170 = vmatpush1.msra.mxu0 0.0
    %1171 = vmatprep.subr.mxu0 0.0
    %1172 = vmatpush1.msra.mxu0 0.0
    %1173 = vmatprep.subr.mxu0 0.0
    %1174 = vmatpush1.msra.mxu0 0.0
    %1175 = vmatprep.subr.mxu0 0.0
    %1176 = vmatpush1.msra.mxu0 0.0
    %1177 = vmatprep.subr.mxu0 0.0
    %1178 = vmatpush1.msra.mxu0 0.0
    %1179 = vmatprep.subr.mxu0 0.0
    %1180 = vmatpush1.msra.mxu0 0.0
    %1181 = vmatprep.subr.mxu0 0.0
    %1182 = vmatpush1.msra.mxu0 0.0
    %1183 = vmatprep.subr.mxu0 0.0
    %1184 = vmatpush1.msra.mxu0 0.0
    %1185 = vmatprep.mubr.f32.mxu0 0.0
    %1186 = vmatmul.mubr.f32.gmra.mrb[0].mxu0 %v1119
    %v1187 = vpop.f32.mrb[0].mxu0
    %v1188 = vadd.f32 %v54, %v1187
    %v1189 = vpop.f32.mrb[0].mxu0
    %1190 = vdwg.mxu0
    %v1191 = vxor.u32 %v1188, 2147483648
    %v1192 = vmul.f32 %v1191, 1.442695
    %v1193 = vpow.pop %v1192
    %v1194 = vadd.f32 %v1193, 1.0
    %v1195 = vrcp.pop %v1194
    %v1196 = vmul.f32 1.0, %v1195
    %v1197 = vmul.f32 %v1196, 2.0
    %v1198 = vsub.f32 %v1197, 1.0
    %v1199 = vmul.f32 %v1196, %v993
    %1201 = vrot.lane.b32.xlu0 %v1198, 64
    %v1202 = vpop.permute.xlu0 %1201
    %v1204 = vmul.f32 %v1196, %v1202
    %1206 = vrot.lane.b32.xlu0 %v1204, 32
    %v1207 = vpop.permute.xlu0 %1206
    %v1209 = vadd.f32 %v1199, %v1207
    %v1210 = vtanh.pop %v1209
    %1212 = vrot.lane.b32.xlu0 %v1210, 64
    %v1213 = vpop.permute.xlu0 %1212
    %v1215 = vmul.f32 %v1196, %v1213
    %v1216 = vrot.slane %v1106, 4
    %1217 = vrot.lane.b32.xlu0 %v1216, 32
    %v1218 = vpop.permute.xlu0 %1217
    %v1219 = vsel %vm139, %v1218, 0
    %1221 = vmatprep.subr.mxu0 0.0
    %1222 = vmatpush1.msra.mxu0 %v41
    %1223 = vmatprep.subr.mxu0 0.0
    %1224 = vmatpush1.msra.mxu0 %v42
    %1225 = vmatprep.subr.mxu0 0.0
    %1226 = vmatpush1.msra.mxu0 %v43
    %1227 = vmatprep.subr.mxu0 0.0
    %1228 = vmatpush1.msra.mxu0 %v44
    %1229 = vmatprep.subr.mxu0 0.0
    %1230 = vmatpush1.msra.mxu0 0.0
    %1231 = vmatprep.subr.mxu0 0.0
    %1232 = vmatpush1.msra.mxu0 0.0
    %1233 = vmatprep.subr.mxu0 0.0
    %1234 = vmatpush1.msra.mxu0 0.0
    %1235 = vmatprep.subr.mxu0 0.0
    %1236 = vmatpush1.msra.mxu0 0.0
    %1237 = vmatprep.subr.mxu0 0.0
    %1238 = vmatpush1.msra.mxu0 0.0
    %1239 = vmatprep.subr.mxu0 0.0
    %1240 = vmatpush1.msra.mxu0 0.0
    %1241 = vmatprep.subr.mxu0 0.0
    %1242 = vmatpush1.msra.mxu0 0.0
    %1243 = vmatprep.subr.mxu0 0.0
    %1244 = vmatpush1.msra.mxu0 0.0
    %1245 = vmatprep.subr.mxu0 0.0
    %1246 = vmatpush1.msra.mxu0 0.0
    %1247 = vmatprep.subr.mxu0 0.0
    %1248 = vmatpush1.msra.mxu0 0.0
    %1249 = vmatprep.subr.mxu0 0.0
    %1250 = vmatpush1.msra.mxu0 0.0
    %1251 = vmatprep.subr.mxu0 0.0
    %1252 = vmatpush1.msra.mxu0 0.0
    %1253 = vmatprep.subr.mxu0 0.0
    %1254 = vmatpush1.msra.mxu0 0.0
    %1255 = vmatprep.subr.mxu0 0.0
    %1256 = vmatpush1.msra.mxu0 0.0
    %1257 = vmatprep.subr.mxu0 0.0
    %1258 = vmatpush1.msra.mxu0 0.0
    %1259 = vmatprep.subr.mxu0 0.0
    %1260 = vmatpush1.msra.mxu0 0.0
    %1261 = vmatprep.subr.mxu0 0.0
    %1262 = vmatpush1.msra.mxu0 0.0
    %1263 = vmatprep.subr.mxu0 0.0
    %1264 = vmatpush1.msra.mxu0 0.0
    %1265 = vmatprep.subr.mxu0 0.0
    %1266 = vmatpush1.msra.mxu0 0.0
    %1267 = vmatprep.subr.mxu0 0.0
    %1268 = vmatpush1.msra.mxu0 0.0
    %1269 = vmatprep.subr.mxu0 0.0
    %1270 = vmatpush1.msra.mxu0 0.0
    %1271 = vmatprep.subr.mxu0 0.0
    %1272 = vmatpush1.msra.mxu0 0.0
    %1273 = vmatprep.subr.mxu0 0.0
    %1274 = vmatpush1.msra.mxu0 0.0
    %1275 = vmatprep.subr.mxu0 0.0
    %1276 = vmatpush1.msra.mxu0 0.0
    %1277 = vmatprep.subr.mxu0 0.0
    %1278 = vmatpush1.msra.mxu0 0.0
    %1279 = vmatprep.subr.mxu0 0.0
    %1280 = vmatpush1.msra.mxu0 0.0
    %1281 = vmatprep.subr.mxu0 0.0
    %1282 = vmatpush1.msra.mxu0 0.0
    %1283 = vmatprep.subr.mxu0 0.0
    %1284 = vmatpush1.msra.mxu0 0.0
    %1285 = vmatprep.mubr.f32.mxu0 0.0
    %1286 = vmatmul.mubr.f32.gmra.mrb[0].mxu0 %v1219
    %v1287 = vpop.f32.mrb[0].mxu0
    %v1288 = vadd.f32 0.0, %v1287
    %v1289 = vpop.f32.mrb[0].mxu0
    %1290 = vdwg.mxu0
    %v1292 = vrot.slane %v1288, 3
    %v1294 = vadd.f32 %v136, %v1292
    %v1295 = vxor.u32 %v1294, 2147483648
    %v1296 = vmul.f32 %v1295, 1.442695
    %v1297 = vpow.pop %v1296
    %v1298 = vadd.f32 %v1297, 1.0
    %v1299 = vrcp.pop %v1298
    %v1300 = vmul.f32 1.0, %v1299
    %v1301 = vmul.f32 %v1300, 2.0
    %v1302 = vsub.f32 %v1301, 1.0
    %v1304 = vrot.slane %v1100, 7
    %v1306 = vmul.f32 %v1300, %v1304
    %1308 = vrot.lane.b32.xlu0 %v1302, 64
    %v1309 = vpop.permute.xlu0 %1308
    %v1311 = vmul.f32 %v1300, %v1309
    %1313 = vrot.lane.b32.xlu0 %v1311, 32
    %v1314 = vpop.permute.xlu0 %1313
    %v1316 = vadd.f32 %v1306, %v1314
    %v1317 = vtanh.pop %v1316
    %1319 = vrot.lane.b32.xlu0 %v1317, 64
    %v1320 = vpop.permute.xlu0 %1319
    %v1322 = vmul.f32 %v1300, %v1320
    %1324 = vrot.lane.b32.xlu0 %v1322, 32
    %v1325 = vpop.permute.xlu0 %1324
    %v1328 = vrot.slane %v1215, 3
    %1329 = vrot.lane.b32.xlu0 %v1328, 64
    %v1330 = vpop.permute.xlu0 %1329
    %v1332 = vsel %vm139, %v1325, %v1330
    %v1334 = vrot.slane %v1332, 5
    %v1335 = vsel %vm252, %v1334, 0
    %1337 = vmatprep.subr.mxu0 0.0
    %1338 = vmatpush1.msra.mxu0 %v46
    %1339 = vmatprep.subr.mxu0 0.0
    %1340 = vmatpush1.msra.mxu0 %v47
    %1341 = vmatprep.subr.mxu0 0.0
    %1342 = vmatpush1.msra.mxu0 %v48
    %1343 = vmatprep.subr.mxu0 0.0
    %1344 = vmatpush1.msra.mxu0 %v49
    %1345 = vmatprep.subr.mxu0 0.0
    %1346 = vmatpush1.msra.mxu0 %v50
    %1347 = vmatprep.subr.mxu0 0.0
    %1348 = vmatpush1.msra.mxu0 %v51
    %1349 = vmatprep.subr.mxu0 0.0
    %1350 = vmatpush1.msra.mxu0 %v52
    %1351 = vmatprep.subr.mxu0 0.0
    %1352 = vmatpush1.msra.mxu0 %v53
    %1353 = vmatprep.subr.mxu0 0.0
    %1354 = vmatpush1.msra.mxu0 0.0
    %1355 = vmatprep.subr.mxu0 0.0
    %1356 = vmatpush1.msra.mxu0 0.0
    %1357 = vmatprep.subr.mxu0 0.0
    %1358 = vmatpush1.msra.mxu0 0.0
    %1359 = vmatprep.subr.mxu0 0.0
    %1360 = vmatpush1.msra.mxu0 0.0
    %1361 = vmatprep.subr.mxu0 0.0
    %1362 = vmatpush1.msra.mxu0 0.0
    %1363 = vmatprep.subr.mxu0 0.0
    %1364 = vmatpush1.msra.mxu0 0.0
    %1365 = vmatprep.subr.mxu0 0.0
    %1366 = vmatpush1.msra.mxu0 0.0
    %1367 = vmatprep.subr.mxu0 0.0
    %1368 = vmatpush1.msra.mxu0 0.0
    %1369 = vmatprep.subr.mxu0 0.0
    %1370 = vmatpush1.msra.mxu0 0.0
    %1371 = vmatprep.subr.mxu0 0.0
    %1372 = vmatpush1.msra.mxu0 0.0
    %1373 = vmatprep.subr.mxu0 0.0
    %1374 = vmatpush1.msra.mxu0 0.0
    %1375 = vmatprep.subr.mxu0 0.0
    %1376 = vmatpush1.msra.mxu0 0.0
    %1377 = vmatprep.subr.mxu0 0.0
    %1378 = vmatpush1.msra.mxu0 0.0
    %1379 = vmatprep.subr.mxu0 0.0
    %1380 = vmatpush1.msra.mxu0 0.0
    %1381 = vmatprep.subr.mxu0 0.0
    %1382 = vmatpush1.msra.mxu0 0.0
    %1383 = vmatprep.subr.mxu0 0.0
    %1384 = vmatpush1.msra.mxu0 0.0
    %1385 = vmatprep.subr.mxu0 0.0
    %1386 = vmatpush1.msra.mxu0 0.0
    %1387 = vmatprep.subr.mxu0 0.0
    %1388 = vmatpush1.msra.mxu0 0.0
    %1389 = vmatprep.subr.mxu0 0.0
    %1390 = vmatpush1.msra.mxu0 0.0
    %1391 = vmatprep.subr.mxu0 0.0
    %1392 = vmatpush1.msra.mxu0 0.0
    %1393 = vmatprep.subr.mxu0 0.0
    %1394 = vmatpush1.msra.mxu0 0.0
    %1395 = vmatprep.subr.mxu0 0.0
    %1396 = vmatpush1.msra.mxu0 0.0
    %1397 = vmatprep.subr.mxu0 0.0
    %1398 = vmatpush1.msra.mxu0 0.0
    %1399 = vmatprep.subr.mxu0 0.0
    %1400 = vmatpush1.msra.mxu0 0.0
    %1401 = vmatprep.mubr.f32.mxu0 0.0
    %1402 = vmatmul.mubr.f32.gmra.mrb[0].mxu0 %v1335
    %v1403 = vpop.f32.mrb[0].mxu0
    %v1404 = vadd.f32 %v54, %v1403
    %v1405 = vpop.f32.mrb[0].mxu0
    %1406 = vdwg.mxu0
    %v1407 = vxor.u32 %v1404, 2147483648
    %v1408 = vmul.f32 %v1407, 1.442695
    %v1409 = vpow.pop %v1408
    %v1410 = vadd.f32 %v1409, 1.0
    %v1411 = vrcp.pop %v1410
    %v1412 = vmul.f32 1.0, %v1411
    %v1413 = vmul.f32 %v1412, 2.0
    %v1414 = vsub.f32 %v1413, 1.0
    %v1415 = vmul.f32 %v1412, %v1209
    %1417 = vrot.lane.b32.xlu0 %v1414, 64
    %v1418 = vpop.permute.xlu0 %1417
    %v1420 = vmul.f32 %v1412, %v1418
    %1422 = vrot.lane.b32.xlu0 %v1420, 32
    %v1423 = vpop.permute.xlu0 %1422
    %v1425 = vadd.f32 %v1415, %v1423
    %v1426 = vtanh.pop %v1425
    %1428 = vrot.lane.b32.xlu0 %v1426, 64
    %v1429 = vpop.permute.xlu0 %1428
    %v1431 = vmul.f32 %v1412, %v1429
    %v1432 = vrot.slane %v1322, 5
    %1433 = vrot.lane.b32.xlu0 %v1432, 32
    %v1434 = vpop.permute.xlu0 %1433
    %v1435 = vsel %vm139, %v1434, 0
    %1437 = vmatprep.subr.mxu0 0.0
    %1438 = vmatpush1.msra.mxu0 %v41
    %1439 = vmatprep.subr.mxu0 0.0
    %1440 = vmatpush1.msra.mxu0 %v42
    %1441 = vmatprep.subr.mxu0 0.0
    %1442 = vmatpush1.msra.mxu0 %v43
    %1443 = vmatprep.subr.mxu0 0.0
    %1444 = vmatpush1.msra.mxu0 %v44
    %1445 = vmatprep.subr.mxu0 0.0
    %1446 = vmatpush1.msra.mxu0 0.0
    %1447 = vmatprep.subr.mxu0 0.0
    %1448 = vmatpush1.msra.mxu0 0.0
    %1449 = vmatprep.subr.mxu0 0.0
    %1450 = vmatpush1.msra.mxu0 0.0
    %1451 = vmatprep.subr.mxu0 0.0
    %1452 = vmatpush1.msra.mxu0 0.0
    %1453 = vmatprep.subr.mxu0 0.0
    %1454 = vmatpush1.msra.mxu0 0.0
    %1455 = vmatprep.subr.mxu0 0.0
    %1456 = vmatpush1.msra.mxu0 0.0
    %1457 = vmatprep.subr.mxu0 0.0
    %1458 = vmatpush1.msra.mxu0 0.0
    %1459 = vmatprep.subr.mxu0 0.0
    %1460 = vmatpush1.msra.mxu0 0.0
    %1461 = vmatprep.subr.mxu0 0.0
    %1462 = vmatpush1.msra.mxu0 0.0
    %1463 = vmatprep.subr.mxu0 0.0
    %1464 = vmatpush1.msra.mxu0 0.0
    %1465 = vmatprep.subr.mxu0 0.0
    %1466 = vmatpush1.msra.mxu0 0.0
    %1467 = vmatprep.subr.mxu0 0.0
    %1468 = vmatpush1.msra.mxu0 0.0
    %1469 = vmatprep.subr.mxu0 0.0
    %1470 = vmatpush1.msra.mxu0 0.0
    %1471 = vmatprep.subr.mxu0 0.0
    %1472 = vmatpush1.msra.mxu0 0.0
    %1473 = vmatprep.subr.mxu0 0.0
    %1474 = vmatpush1.msra.mxu0 0.0
    %1475 = vmatprep.subr.mxu0 0.0
    %1476 = vmatpush1.msra.mxu0 0.0
    %1477 = vmatprep.subr.mxu0 0.0
    %1478 = vmatpush1.msra.mxu0 0.0
    %1479 = vmatprep.subr.mxu0 0.0
    %1480 = vmatpush1.msra.mxu0 0.0
    %1481 = vmatprep.subr.mxu0 0.0
    %1482 = vmatpush1.msra.mxu0 0.0
    %1483 = vmatprep.subr.mxu0 0.0
    %1484 = vmatpush1.msra.mxu0 0.0
    %1485 = vmatprep.subr.mxu0 0.0
    %1486 = vmatpush1.msra.mxu0 0.0
    %1487 = vmatprep.subr.mxu0 0.0
    %1488 = vmatpush1.msra.mxu0 0.0
    %1489 = vmatprep.subr.mxu0 0.0
    %1490 = vmatpush1.msra.mxu0 0.0
    %1491 = vmatprep.subr.mxu0 0.0
    %1492 = vmatpush1.msra.mxu0 0.0
    %1493 = vmatprep.subr.mxu0 0.0
    %1494 = vmatpush1.msra.mxu0 0.0
    %1495 = vmatprep.subr.mxu0 0.0
    %1496 = vmatpush1.msra.mxu0 0.0
    %1497 = vmatprep.subr.mxu0 0.0
    %1498 = vmatpush1.msra.mxu0 0.0
    %1499 = vmatprep.subr.mxu0 0.0
    %1500 = vmatpush1.msra.mxu0 0.0
    %1501 = vmatprep.mubr.f32.mxu0 0.0
    %1502 = vmatmul.mubr.f32.gmra.mrb[0].mxu0 %v1435
    %v1503 = vpop.f32.mrb[0].mxu0
    %v1504 = vadd.f32 0.0, %v1503
    %v1505 = vpop.f32.mrb[0].mxu0
    %1506 = vdwg.mxu0
    %v1508 = vrot.slane %v1504, 2
    %v1510 = vadd.f32 %v136, %v1508
    %v1511 = vxor.u32 %v1510, 2147483648
    %v1512 = vmul.f32 %v1511, 1.442695
    %v1513 = vpow.pop %v1512
    %v1514 = vadd.f32 %v1513, 1.0
    %v1515 = vrcp.pop %v1514
    %v1516 = vmul.f32 1.0, %v1515
    %v1517 = vmul.f32 %v1516, 2.0
    %v1518 = vsub.f32 %v1517, 1.0
    %v1520 = vrot.slane %v1316, 7
    %v1522 = vmul.f32 %v1516, %v1520
    %1524 = vrot.lane.b32.xlu0 %v1518, 64
    %v1525 = vpop.permute.xlu0 %1524
    %v1527 = vmul.f32 %v1516, %v1525
    %1529 = vrot.lane.b32.xlu0 %v1527, 32
    %v1530 = vpop.permute.xlu0 %1529
    %v1532 = vadd.f32 %v1522, %v1530
    %v1533 = vtanh.pop %v1532
    %1535 = vrot.lane.b32.xlu0 %v1533, 64
    %v1536 = vpop.permute.xlu0 %1535
    %v1538 = vmul.f32 %v1516, %v1536
    %1540 = vrot.lane.b32.xlu0 %v1538, 32
    %v1541 = vpop.permute.xlu0 %1540
    %v1544 = vrot.slane %v1431, 2
    %1545 = vrot.lane.b32.xlu0 %v1544, 64
    %v1546 = vpop.permute.xlu0 %1545
    %v1548 = vsel %vm139, %v1541, %v1546
    %v1550 = vrot.slane %v1548, 6
    %v1551 = vsel %vm252, %v1550, 0
    %1553 = vmatprep.subr.mxu0 0.0
    %1554 = vmatpush1.msra.mxu0 %v46
    %1555 = vmatprep.subr.mxu0 0.0
    %1556 = vmatpush1.msra.mxu0 %v47
    %1557 = vmatprep.subr.mxu0 0.0
    %1558 = vmatpush1.msra.mxu0 %v48
    %1559 = vmatprep.subr.mxu0 0.0
    %1560 = vmatpush1.msra.mxu0 %v49
    %1561 = vmatprep.subr.mxu0 0.0
    %1562 = vmatpush1.msra.mxu0 %v50
    %1563 = vmatprep.subr.mxu0 0.0
    %1564 = vmatpush1.msra.mxu0 %v51
    %1565 = vmatprep.subr.mxu0 0.0
    %1566 = vmatpush1.msra.mxu0 %v52
    %1567 = vmatprep.subr.mxu0 0.0
    %1568 = vmatpush1.msra.mxu0 %v53
    %1569 = vmatprep.subr.mxu0 0.0
    %1570 = vmatpush1.msra.mxu0 0.0
    %1571 = vmatprep.subr.mxu0 0.0
    %1572 = vmatpush1.msra.mxu0 0.0
    %1573 = vmatprep.subr.mxu0 0.0
    %1574 = vmatpush1.msra.mxu0 0.0
    %1575 = vmatprep.subr.mxu0 0.0
    %1576 = vmatpush1.msra.mxu0 0.0
    %1577 = vmatprep.subr.mxu0 0.0
    %1578 = vmatpush1.msra.mxu0 0.0
    %1579 = vmatprep.subr.mxu0 0.0
    %1580 = vmatpush1.msra.mxu0 0.0
    %1581 = vmatprep.subr.mxu0 0.0
    %1582 = vmatpush1.msra.mxu0 0.0
    %1583 = vmatprep.subr.mxu0 0.0
    %1584 = vmatpush1.msra.mxu0 0.0
    %1585 = vmatprep.subr.mxu0 0.0
    %1586 = vmatpush1.msra.mxu0 0.0
    %1587 = vmatprep.subr.mxu0 0.0
    %1588 = vmatpush1.msra.mxu0 0.0
    %1589 = vmatprep.subr.mxu0 0.0
    %1590 = vmatpush1.msra.mxu0 0.0
    %1591 = vmatprep.subr.mxu0 0.0
    %1592 = vmatpush1.msra.mxu0 0.0
    %1593 = vmatprep.subr.mxu0 0.0
    %1594 = vmatpush1.msra.mxu0 0.0
    %1595 = vmatprep.subr.mxu0 0.0
    %1596 = vmatpush1.msra.mxu0 0.0
    %1597 = vmatprep.subr.mxu0 0.0
    %1598 = vmatpush1.msra.mxu0 0.0
    %1599 = vmatprep.subr.mxu0 0.0
    %1600 = vmatpush1.msra.mxu0 0.0
    %1601 = vmatprep.subr.mxu0 0.0
    %1602 = vmatpush1.msra.mxu0 0.0
    %1603 = vmatprep.subr.mxu0 0.0
    %1604 = vmatpush1.msra.mxu0 0.0
    %1605 = vmatprep.subr.mxu0 0.0
    %1606 = vmatpush1.msra.mxu0 0.0
    %1607 = vmatprep.subr.mxu0 0.0
    %1608 = vmatpush1.msra.mxu0 0.0
    %1609 = vmatprep.subr.mxu0 0.0
    %1610 = vmatpush1.msra.mxu0 0.0
    %1611 = vmatprep.subr.mxu0 0.0
    %1612 = vmatpush1.msra.mxu0 0.0
    %1613 = vmatprep.subr.mxu0 0.0
    %1614 = vmatpush1.msra.mxu0 0.0
    %1615 = vmatprep.subr.mxu0 0.0
    %1616 = vmatpush1.msra.mxu0 0.0
    %1617 = vmatprep.mubr.f32.mxu0 0.0
    %1618 = vmatmul.mubr.f32.gmra.mrb[0].mxu0 %v1551
    %v1619 = vpop.f32.mrb[0].mxu0
    %v1620 = vadd.f32 %v54, %v1619
    %v1621 = vpop.f32.mrb[0].mxu0
    %1622 = vdwg.mxu0
    %v1623 = vxor.u32 %v1620, 2147483648
    %v1624 = vmul.f32 %v1623, 1.442695
    %v1625 = vpow.pop %v1624
    %v1626 = vadd.f32 %v1625, 1.0
    %v1627 = vrcp.pop %v1626
    %v1628 = vmul.f32 1.0, %v1627
    %v1629 = vmul.f32 %v1628, 2.0
    %v1630 = vsub.f32 %v1629, 1.0
    %v1631 = vmul.f32 %v1628, %v1425
    %1633 = vrot.lane.b32.xlu0 %v1630, 64
    %v1634 = vpop.permute.xlu0 %1633
    %v1636 = vmul.f32 %v1628, %v1634
    %1638 = vrot.lane.b32.xlu0 %v1636, 32
    %v1639 = vpop.permute.xlu0 %1638
    %v1641 = vadd.f32 %v1631, %v1639
    %v1642 = vtanh.pop %v1641
    %1644 = vrot.lane.b32.xlu0 %v1642, 64
    %v1645 = vpop.permute.xlu0 %1644
    %v1647 = vmul.f32 %v1628, %v1645
    %v1648 = vrot.slane %v1538, 6
    %1649 = vrot.lane.b32.xlu0 %v1648, 32
    %v1650 = vpop.permute.xlu0 %1649
    %v1651 = vsel %vm139, %v1650, 0
    %1653 = vmatprep.subr.mxu0 0.0
    %1654 = vmatpush1.msra.mxu0 %v41
    %1655 = vmatprep.subr.mxu0 0.0
    %1656 = vmatpush1.msra.mxu0 %v42
    %1657 = vmatprep.subr.mxu0 0.0
    %1658 = vmatpush1.msra.mxu0 %v43
    %1659 = vmatprep.subr.mxu0 0.0
    %1660 = vmatpush1.msra.mxu0 %v44
    %1661 = vmatprep.subr.mxu0 0.0
    %1662 = vmatpush1.msra.mxu0 0.0
    %1663 = vmatprep.subr.mxu0 0.0
    %1664 = vmatpush1.msra.mxu0 0.0
    %1665 = vmatprep.subr.mxu0 0.0
    %1666 = vmatpush1.msra.mxu0 0.0
    %1667 = vmatprep.subr.mxu0 0.0
    %1668 = vmatpush1.msra.mxu0 0.0
    %1669 = vmatprep.subr.mxu0 0.0
    %1670 = vmatpush1.msra.mxu0 0.0
    %1671 = vmatprep.subr.mxu0 0.0
    %1672 = vmatpush1.msra.mxu0 0.0
    %1673 = vmatprep.subr.mxu0 0.0
    %1674 = vmatpush1.msra.mxu0 0.0
    %1675 = vmatprep.subr.mxu0 0.0
    %1676 = vmatpush1.msra.mxu0 0.0
    %1677 = vmatprep.subr.mxu0 0.0
    %1678 = vmatpush1.msra.mxu0 0.0
    %1679 = vmatprep.subr.mxu0 0.0
    %1680 = vmatpush1.msra.mxu0 0.0
    %1681 = vmatprep.subr.mxu0 0.0
    %1682 = vmatpush1.msra.mxu0 0.0
    %1683 = vmatprep.subr.mxu0 0.0
    %1684 = vmatpush1.msra.mxu0 0.0
    %1685 = vmatprep.subr.mxu0 0.0
    %1686 = vmatpush1.msra.mxu0 0.0
    %1687 = vmatprep.subr.mxu0 0.0
    %1688 = vmatpush1.msra.mxu0 0.0
    %1689 = vmatprep.subr.mxu0 0.0
    %1690 = vmatpush1.msra.mxu0 0.0
    %1691 = vmatprep.subr.mxu0 0.0
    %1692 = vmatpush1.msra.mxu0 0.0
    %1693 = vmatprep.subr.mxu0 0.0
    %1694 = vmatpush1.msra.mxu0 0.0
    %1695 = vmatprep.subr.mxu0 0.0
    %1696 = vmatpush1.msra.mxu0 0.0
    %1697 = vmatprep.subr.mxu0 0.0
    %1698 = vmatpush1.msra.mxu0 0.0
    %1699 = vmatprep.subr.mxu0 0.0
    %1700 = vmatpush1.msra.mxu0 0.0
    %1701 = vmatprep.subr.mxu0 0.0
    %1702 = vmatpush1.msra.mxu0 0.0
    %1703 = vmatprep.subr.mxu0 0.0
    %1704 = vmatpush1.msra.mxu0 0.0
    %1705 = vmatprep.subr.mxu0 0.0
    %1706 = vmatpush1.msra.mxu0 0.0
    %1707 = vmatprep.subr.mxu0 0.0
    %1708 = vmatpush1.msra.mxu0 0.0
    %1709 = vmatprep.subr.mxu0 0.0
    %1710 = vmatpush1.msra.mxu0 0.0
    %1711 = vmatprep.subr.mxu0 0.0
    %1712 = vmatpush1.msra.mxu0 0.0
    %1713 = vmatprep.subr.mxu0 0.0
    %1714 = vmatpush1.msra.mxu0 0.0
    %1715 = vmatprep.subr.mxu0 0.0
    %1716 = vmatpush1.msra.mxu0 0.0
    %1717 = vmatprep.mubr.f32.mxu0 0.0
    %1718 = vmatmul.mubr.f32.gmra.mrb[0].mxu0 %v1651
    %v1719 = vpop.f32.mrb[0].mxu0
    %v1720 = vadd.f32 0.0, %v1719
    %v1721 = vpop.f32.mrb[0].mxu0
    %1722 = vdwg.mxu0
    %v1724 = vrot.slane %v1720, 1
    %v1726 = vadd.f32 %v136, %v1724
    %v1727 = vxor.u32 %v1726, 2147483648
    %v1728 = vmul.f32 %v1727, 1.442695
    %v1729 = vpow.pop %v1728
    %v1730 = vadd.f32 %v1729, 1.0
    %v1731 = vrcp.pop %v1730
    %v1732 = vmul.f32 1.0, %v1731
    %v1733 = vmul.f32 %v1732, 2.0
    %v1734 = vsub.f32 %v1733, 1.0
    %v1736 = vrot.slane %v1532, 7
    %v1738 = vmul.f32 %v1732, %v1736
    %1740 = vrot.lane.b32.xlu0 %v1734, 64
    %v1741 = vpop.permute.xlu0 %1740
    %v1743 = vmul.f32 %v1732, %v1741
    %1745 = vrot.lane.b32.xlu0 %v1743, 32
    %v1746 = vpop.permute.xlu0 %1745
    %v1748 = vadd.f32 %v1738, %v1746
    %v1749 = vtanh.pop %v1748
    %1751 = vrot.lane.b32.xlu0 %v1749, 64
    %v1752 = vpop.permute.xlu0 %1751
    %v1754 = vmul.f32 %v1732, %v1752
    %1756 = vrot.lane.b32.xlu0 %v1754, 32
    %v1757 = vpop.permute.xlu0 %1756
    %v1760 = vrot.slane %v1647, 1
    %1761 = vrot.lane.b32.xlu0 %v1760, 64
    %v1762 = vpop.permute.xlu0 %1761
    %v1764 = vsel %vm139, %v1757, %v1762
    %v1766 = vrot.slane %v1764, 7
    %v1767 = vsel %vm252, %v1766, 0
    %1769 = vmatprep.subr.mxu0 0.0
    %1770 = vmatpush1.msra.mxu0 %v46
    %1771 = vmatprep.subr.mxu0 0.0
    %1772 = vmatpush1.msra.mxu0 %v47
    %1773 = vmatprep.subr.mxu0 0.0
    %1774 = vmatpush1.msra.mxu0 %v48
    %1775 = vmatprep.subr.mxu0 0.0
    %1776 = vmatpush1.msra.mxu0 %v49
    %1777 = vmatprep.subr.mxu0 0.0
    %1778 = vmatpush1.msra.mxu0 %v50
    %1779 = vmatprep.subr.mxu0 0.0
    %1780 = vmatpush1.msra.mxu0 %v51
    %1781 = vmatprep.subr.mxu0 0.0
    %1782 = vmatpush1.msra.mxu0 %v52
    %1783 = vmatprep.subr.mxu0 0.0
    %1784 = vmatpush1.msra.mxu0 %v53
    %1785 = vmatprep.subr.mxu0 0.0
    %1786 = vmatpush1.msra.mxu0 0.0
    %1787 = vmatprep.subr.mxu0 0.0
    %1788 = vmatpush1.msra.mxu0 0.0
    %1789 = vmatprep.subr.mxu0 0.0
    %1790 = vmatpush1.msra.mxu0 0.0
    %1791 = vmatprep.subr.mxu0 0.0
    %1792 = vmatpush1.msra.mxu0 0.0
    %1793 = vmatprep.subr.mxu0 0.0
    %1794 = vmatpush1.msra.mxu0 0.0
    %1795 = vmatprep.subr.mxu0 0.0
    %1796 = vmatpush1.msra.mxu0 0.0
    %1797 = vmatprep.subr.mxu0 0.0
    %1798 = vmatpush1.msra.mxu0 0.0
    %1799 = vmatprep.subr.mxu0 0.0
    %1800 = vmatpush1.msra.mxu0 0.0
    %1801 = vmatprep.subr.mxu0 0.0
    %1802 = vmatpush1.msra.mxu0 0.0
    %1803 = vmatprep.subr.mxu0 0.0
    %1804 = vmatpush1.msra.mxu0 0.0
    %1805 = vmatprep.subr.mxu0 0.0
    %1806 = vmatpush1.msra.mxu0 0.0
    %1807 = vmatprep.subr.mxu0 0.0
    %1808 = vmatpush1.msra.mxu0 0.0
    %1809 = vmatprep.subr.mxu0 0.0
    %1810 = vmatpush1.msra.mxu0 0.0
    %1811 = vmatprep.subr.mxu0 0.0
    %1812 = vmatpush1.msra.mxu0 0.0
    %1813 = vmatprep.subr.mxu0 0.0
    %1814 = vmatpush1.msra.mxu0 0.0
    %1815 = vmatprep.subr.mxu0 0.0
    %1816 = vmatpush1.msra.mxu0 0.0
    %1817 = vmatprep.subr.mxu0 0.0
    %1818 = vmatpush1.msra.mxu0 0.0
    %1819 = vmatprep.subr.mxu0 0.0
    %1820 = vmatpush1.msra.mxu0 0.0
    %1821 = vmatprep.subr.mxu0 0.0
    %1822 = vmatpush1.msra.mxu0 0.0
    %1823 = vmatprep.subr.mxu0 0.0
    %1824 = vmatpush1.msra.mxu0 0.0
    %1825 = vmatprep.subr.mxu0 0.0
    %1826 = vmatpush1.msra.mxu0 0.0
    %1827 = vmatprep.subr.mxu0 0.0
    %1828 = vmatpush1.msra.mxu0 0.0
    %1829 = vmatprep.subr.mxu0 0.0
    %1830 = vmatpush1.msra.mxu0 0.0
    %1831 = vmatprep.subr.mxu0 0.0
    %1832 = vmatpush1.msra.mxu0 0.0
    %1833 = vmatprep.mubr.f32.mxu0 0.0
    %1834 = vmatmul.mubr.f32.gmra.mrb[0].mxu0 %v1767
    %v1835 = vpop.f32.mrb[0].mxu0
    %v1836 = vadd.f32 %v54, %v1835
    %v1837 = vpop.f32.mrb[0].mxu0
    %1838 = vdwg.mxu0
    %v1839 = vxor.u32 %v1836, 2147483648
    %v1840 = vmul.f32 %v1839, 1.442695
    %v1841 = vpow.pop %v1840
    %v1842 = vadd.f32 %v1841, 1.0
    %v1843 = vrcp.pop %v1842
    %v1844 = vmul.f32 1.0, %v1843
    %v1845 = vmul.f32 %v1844, 2.0
    %v1846 = vsub.f32 %v1845, 1.0
    %v1847 = vmul.f32 %v1844, %v1641
    %1849 = vrot.lane.b32.xlu0 %v1846, 64
    %v1850 = vpop.permute.xlu0 %1849
    %v1852 = vmul.f32 %v1844, %v1850
    %1854 = vrot.lane.b32.xlu0 %v1852, 32
    %v1855 = vpop.permute.xlu0 %1854
    %v1857 = vadd.f32 %v1847, %v1855
    %v1858 = vtanh.pop %v1857
    %1860 = vrot.lane.b32.xlu0 %v1858, 64
    %v1861 = vpop.permute.xlu0 %1860
    %v1863 = vmul.f32 %v1844, %v1861
    %1865 = vrot.lane.b32.xlu0 %v1863, 32
    %v1866 = vpop.permute.xlu0 %1865
    %v1867 = vsel %vm139, %v1866, 0
    %1869 = vmatprep.subr.mxu0 0.0
    %1870 = vmatpush1.msra.mxu0 %v55
    %1871 = vmatprep.subr.mxu0 0.0
    %1872 = vmatpush1.msra.mxu0 %v56
    %1873 = vmatprep.subr.mxu0 0.0
    %1874 = vmatpush1.msra.mxu0 %v57
    %1875 = vmatprep.subr.mxu0 0.0
    %1876 = vmatpush1.msra.mxu0 %v58
    %1877 = vmatprep.subr.mxu0 0.0
    %1878 = vmatpush1.msra.mxu0 0.0
    %1879 = vmatprep.subr.mxu0 0.0
    %1880 = vmatpush1.msra.mxu0 0.0
    %1881 = vmatprep.subr.mxu0 0.0
    %1882 = vmatpush1.msra.mxu0 0.0
    %1883 = vmatprep.subr.mxu0 0.0
    %1884 = vmatpush1.msra.mxu0 0.0
    %1885 = vmatprep.subr.mxu0 0.0
    %1886 = vmatpush1.msra.mxu0 0.0
    %1887 = vmatprep.subr.mxu0 0.0
    %1888 = vmatpush1.msra.mxu0 0.0
    %1889 = vmatprep.subr.mxu0 0.0
    %1890 = vmatpush1.msra.mxu0 0.0
    %1891 = vmatprep.subr.mxu0 0.0
    %1892 = vmatpush1.msra.mxu0 0.0
    %1893 = vmatprep.subr.mxu0 0.0
    %1894 = vmatpush1.msra.mxu0 0.0
    %1895 = vmatprep.subr.mxu0 0.0
    %1896 = vmatpush1.msra.mxu0 0.0
    %1897 = vmatprep.subr.mxu0 0.0
    %1898 = vmatpush1.msra.mxu0 0.0
    %1899 = vmatprep.subr.mxu0 0.0
    %1900 = vmatpush1.msra.mxu0 0.0
    %1901 = vmatprep.subr.mxu0 0.0
    %1902 = vmatpush1.msra.mxu0 0.0
    %1903 = vmatprep.subr.mxu0 0.0
    %1904 = vmatpush1.msra.mxu0 0.0
    %1905 = vmatprep.subr.mxu0 0.0
    %1906 = vmatpush1.msra.mxu0 0.0
    %1907 = vmatprep.subr.mxu0 0.0
    %1908 = vmatpush1.msra.mxu0 0.0
    %1909 = vmatprep.subr.mxu0 0.0
    %1910 = vmatpush1.msra.mxu0 0.0
    %1911 = vmatprep.subr.mxu0 0.0
    %1912 = vmatpush1.msra.mxu0 0.0
    %1913 = vmatprep.subr.mxu0 0.0
    %1914 = vmatpush1.msra.mxu0 0.0
    %1915 = vmatprep.subr.mxu0 0.0
    %1916 = vmatpush1.msra.mxu0 0.0
    %1917 = vmatprep.subr.mxu0 0.0
    %1918 = vmatpush1.msra.mxu0 0.0
    %1919 = vmatprep.subr.mxu0 0.0
    %1920 = vmatpush1.msra.mxu0 0.0
    %1921 = vmatprep.subr.mxu0 0.0
    %1922 = vmatpush1.msra.mxu0 0.0
    %1923 = vmatprep.subr.mxu0 0.0
    %1924 = vmatpush1.msra.mxu0 0.0
    %1925 = vmatprep.subr.mxu0 0.0
    %1926 = vmatpush1.msra.mxu0 0.0
    %1927 = vmatprep.subr.mxu0 0.0
    %1928 = vmatpush1.msra.mxu0 0.0
    %1929 = vmatprep.subr.mxu0 0.0
    %1930 = vmatpush1.msra.mxu0 0.0
    %1931 = vmatprep.subr.mxu0 0.0
    %1932 = vmatpush1.msra.mxu0 0.0
    %1933 = vmatprep.mubr.f32.mxu0 0.0
    %1934 = vmatmul.mubr.f32.gmra.mrb[0].mxu0 %v1867
    %v1935 = vpop.f32.mrb[0].mxu0
    %v1936 = vadd.f32 %v59, %v1935
    %v1937 = vpop.f32.mrb[0].mxu0
    %1938 = vdwg.mxu0
    %1939 = vst [vmem:[%s2] sm:$0x1] %v1936
    // Predicated region
    $region14: #{lstm_forward.1} parent=1 // pred_check
      _
    $region15: #{lstm_forward.1} parent=1 // pred_check_branch
      %1941 = sbr.rel (0) target = $region17
    $region16: #{lstm_forward.1} parent=1 // pred_region
      _
    $region17: #{lstm_forward.1} parent=1 // pred_fallthru
      _
    // Predicated region
    $region18: #{lstm_forward.1} parent=1 // pred_check
      _
    $region19: #{lstm_forward.1} parent=1 // pred_check_branch
      %1943 = sbr.rel (0) target = $region21
    $region20: #{lstm_forward.1} parent=1 // pred_region
      _
    $region21: #{lstm_forward.1} parent=1 // pred_fallthru
      _
    %1944 = vsyncpa [#allocation3], 1

</llo_original>
